<compile_context>
chip_gen: v7x
topology: tpu7x:2x2x1
jax: 0.10.0
libtpu: 0.0.40
codegen_flags: <defaults>
</compile_context>

<pallas_src>
import functools

import numpy as np

import jax
import jax.numpy as jnp
from jax.experimental import pallas as pl
from jax.experimental.pallas import tpu as pltpu


# ---------------------------------------------------------------------------
# Tiling helper
# ---------------------------------------------------------------------------
def _pick_tile(d, cap, *, min_blocks=1):
    """Pick a tile size for dim `d`.

    Returns the full extent when d is small / not 128-divisible (always legal),
    otherwise the largest 128-multiple divisor of d that is <= cap and — when
    min_blocks > 1 — leaves at least `min_blocks` blocks (so v7x's two
    TensorCores both get work on the parallel axis).
    """
    if d % 128 != 0:
        if d <= cap:
            return d  # full-extent block (allowed regardless of the (8,128) rule)
        raise ValueError(
            f"dim {d} exceeds the tile cap {cap} and is not a multiple of 128; "
            f"pad it to a multiple of 128 first.")
    limit = cap if min_blocks <= 1 else min(cap, d // min_blocks)
    if d <= limit:
        return d
    t = (limit // 128) * 128
    while t >= 128:
        if d % t == 0:
            return t
        t -= 128
    if d <= cap:
        return d
    raise ValueError(f"no legal tile found for dim {d} with cap {cap}.")


def _round_up(x, m):
    return ((x + m - 1) // m) * m


# ---------------------------------------------------------------------------
# Kernel 1: fused propagation step
#   cur_out = A @ cur                        (bf16, only when emit_cur)
#   acc_out = (acc_in + A @ cur) * scale     (f32, LightGCN running sum fused in)
# Grid = (M // tm, K // tk); reduction axis last; hidden dim = one lane-dense block.
# ---------------------------------------------------------------------------
def _prop_step_kernel(a_ref, e_ref, acc_in_ref, *refs, scale, emit_cur,
                      e_resident, tk):
    if emit_cur:
        cur_out_ref, acc_out_ref, mm_ref = refs
    else:
        acc_out_ref, mm_ref = refs
        cur_out_ref = None

    k = pl.program_id(1)

    @pl.when(k == 0)
    def _():
        mm_ref[...] = jnp.zeros_like(mm_ref)

    if e_resident:
        # E is fully resident in VMEM; slice the current k-chunk out of it.
        e_blk = e_ref[pl.ds(pl.multiple_of(k * tk, 128), tk), :]
    else:
        e_blk = e_ref[...]

    mm_ref[...] += jnp.dot(a_ref[...], e_blk, preferred_element_type=jnp.float32)

    @pl.when(k == pl.num_programs(1) - 1)
    def _():
        if emit_cur:
            cur_out_ref[...] = mm_ref[...].astype(cur_out_ref.dtype)
        acc_out_ref[...] = (
            (acc_in_ref[...] + mm_ref[...]) * scale
        ).astype(acc_out_ref.dtype)


def prop_step(graph_bf16, cur_bf16, acc_f32, *, scale, emit_cur=True,
              tm_cap=2048, tk_cap=1024, e_resident_bytes=4 * 1024 * 1024):
    """One propagation layer.

    Returns (A @ cur [bf16], (acc + A @ cur) * scale [f32]) when emit_cur,
    else only the updated f32 accumulator (last layer: the bf16 output is dead).
    """
    M, K = graph_bf16.shape
    K2, H = cur_bf16.shape
    assert K == K2 and acc_f32.shape == (M, H)

    tm = _pick_tile(M, tm_cap, min_blocks=2)   # >=2 blocks => both v7x TCs busy
    tk = _pick_tile(K, tk_cap)
    grid = (M // tm, K // tk)

    # Keep E fully VMEM-resident (single DMA for the whole grid) when small enough.
    e_resident = (K > tk) and (K * H * 2 <= e_resident_bytes)
    if e_resident:
        e_spec = pl.BlockSpec((K, H), lambda i, k: (0, 0))
        e_bytes = K * H * 2
    else:
        e_spec = pl.BlockSpec((tk, H), lambda i, k: (k, 0))
        e_bytes = (M // tm) * K * H * 2

    out_shapes = []
    out_specs = []
    if emit_cur:
        out_shapes.append(jax.ShapeDtypeStruct((M, H), jnp.bfloat16))
        out_specs.append(pl.BlockSpec((tm, H), lambda i, k: (i, 0)))
    out_shapes.append(jax.ShapeDtypeStruct((M, H), jnp.float32))
    out_specs.append(pl.BlockSpec((tm, H), lambda i, k: (i, 0)))

    bytes_accessed = (
        M * K * 2                               # A (bf16), read once
        + e_bytes                               # E (bf16)
        + M * H * 4                             # acc_in (f32)
        + (M * H * 2 if emit_cur else 0)        # cur_out (bf16)
        + M * H * 4                             # acc_out (f32)
    )
    cost = pl.CostEstimate(
        flops=2 * M * K * H + 2 * M * H,
        transcendentals=0,
        bytes_accessed=bytes_accessed,
    )

    result = pl.pallas_call(
        functools.partial(
            _prop_step_kernel, scale=float(scale), emit_cur=emit_cur,
            e_resident=e_resident, tk=tk),
        out_shape=tuple(out_shapes),
        grid_spec=pltpu.PrefetchScalarGridSpec(
            num_scalar_prefetch=0,
            grid=grid,
            in_specs=[
                pl.BlockSpec((tm, tk), lambda i, k: (i, k)),  # A tile
                e_spec,                                       # E (resident or streamed)
                pl.BlockSpec((tm, H), lambda i, k: (i, 0)),   # running acc (resident over k)
            ],
            out_specs=out_specs,
            scratch_shapes=[pltpu.VMEM((tm, H), jnp.float32)],
        ),
        compiler_params=pltpu.CompilerParams(
            dimension_semantics=("parallel", "arbitrary"),
            vmem_limit_bytes=32 * 1024 * 1024,
        ),
        cost_estimate=cost,
        # Update the f32 accumulator in place across layers.
        input_output_aliases={2: (1 if emit_cur else 0)},
    )(graph_bf16, cur_bf16, acc_f32)

    if emit_cur:
        return result[0], result[1]
    return result[0]


def propagation(graph_bf16, emb, n_layers, *, tm_cap=2048, tk_cap=1024):
    """LightGCN propagation: mean of [E, A E, ..., A^L E] with the sum fused in-kernel."""
    if n_layers == 0:
        return emb.astype(jnp.float32)

    N = graph_bf16.shape[0]
    orig_n = N
    # Zero-pad only when a >cap node count is not 128-divisible (full-extent blocks
    # are otherwise always legal). Zero rows/cols are numerically inert for A@E.
    # TODO(synk): pre-pad the graph offline to avoid this per-call N^2 pad.
    need_pad = (N % 128 != 0) and (N > min(tm_cap, tk_cap))
    if need_pad:
        npad = _round_up(N, 128) - N
        graph_bf16 = jnp.pad(graph_bf16, ((0, npad), (0, npad)))
        emb = jnp.pad(emb, ((0, npad), (0, 0)))

    acc = emb.astype(jnp.float32)
    cur = emb.astype(jnp.bfloat16)
    for layer in range(n_layers):
        last = layer == n_layers - 1
        scale = 1.0 / (n_layers + 1) if last else 1.0
        if last:
            acc = prop_step(graph_bf16, cur, acc, scale=scale, emit_cur=False,
                            tm_cap=tm_cap, tk_cap=tk_cap)
        else:
            cur, acc = prop_step(graph_bf16, cur, acc, scale=scale, emit_cur=True,
                                 tm_cap=tm_cap, tk_cap=tk_cap)
    if need_pad:
        acc = acc[:orig_n]
    return acc


# ---------------------------------------------------------------------------
# Kernel 2: fused user_emb_map linear without materializing the (M, 3H) concat:
#   out = ego @ W0 + emb @ W1 + uu @ W2 + b
# f32 activations / weight streamed once; bf16 cast happens in-kernel on the VPU.
# ---------------------------------------------------------------------------
def _fused_linear3_kernel(x0_ref, x1_ref, x2_ref, w_ref, b_ref, o_ref, *, h):
    w = w_ref[...].astype(jnp.bfloat16)
    acc = jnp.dot(x0_ref[...].astype(jnp.bfloat16), w[0:h, :],
                  preferred_element_type=jnp.float32)
    acc = acc + jnp.dot(x1_ref[...].astype(jnp.bfloat16), w[h:2 * h, :],
                        preferred_element_type=jnp.float32)
    acc = acc + jnp.dot(x2_ref[...].astype(jnp.bfloat16), w[2 * h:3 * h, :],
                        preferred_element_type=jnp.float32)
    o_ref[...] = (acc + b_ref[...]).astype(o_ref.dtype)


def fused_linear3(x0, x1, x2, w, b, *, tm_cap=1024, out_dtype=jnp.float32):
    M, H = x0.shape
    assert x1.shape == (M, H) and x2.shape == (M, H)
    assert w.shape == (3 * H, H) and b.shape == (H,)

    orig_m = M
    if M % 128 != 0 and M > tm_cap:
        mpad = _round_up(M, 128) - M
        x0 = jnp.pad(x0, ((0, mpad), (0, 0)))
        x1 = jnp.pad(x1, ((0, mpad), (0, 0)))
        x2 = jnp.pad(x2, ((0, mpad), (0, 0)))
        M = M + mpad

    b2 = b.reshape(1, H).astype(jnp.float32)
    tm = _pick_tile(M, tm_cap, min_blocks=2)
    grid = (M // tm,)

    cost = pl.CostEstimate(
        flops=2 * M * (3 * H) * H,
        transcendentals=0,
        bytes_accessed=3 * M * H * 4 + 3 * H * H * 4 + H * 4 + M * H * 4,
    )

    out = pl.pallas_call(
        functools.partial(_fused_linear3_kernel, h=H),
        out_shape=jax.ShapeDtypeStruct((M, H), out_dtype),
        grid_spec=pltpu.PrefetchScalarGridSpec(
            num_scalar_prefetch=0,
            grid=grid,
            in_specs=[
                pl.BlockSpec((tm, H), lambda i: (i, 0)),
                pl.BlockSpec((tm, H), lambda i: (i, 0)),
                pl.BlockSpec((tm, H), lambda i: (i, 0)),
                pl.BlockSpec((3 * H, H), lambda i: (0, 0)),
                pl.BlockSpec((1, H), lambda i: (0, 0)),
            ],
            out_specs=pl.BlockSpec((tm, H), lambda i: (i, 0)),
        ),
        compiler_params=pltpu.CompilerParams(
            dimension_semantics=("parallel",),
            vmem_limit_bytes=32 * 1024 * 1024,
        ),
        cost_estimate=cost,
    )(x0, x1, x2, w, b2)
    return out[:orig_m]


# ---------------------------------------------------------------------------
# Encoder
# ---------------------------------------------------------------------------
def init_encoder_params(key, num_users, num_items, hidden_dim):
    k1, k2, k3, k4 = jax.random.split(key, 4)
    bound = 1.0 / jnp.sqrt(3.0 * hidden_dim)
    return {
        # nn.init.normal_(..., std=0.1)
        "user_emb_ego": 0.1 * jax.random.normal(k1, (num_users, hidden_dim), jnp.float32),
        "item_emb_ego": 0.1 * jax.random.normal(k2, (num_items, hidden_dim), jnp.float32),
        # nn.Linear(3*hidden, hidden): W stored transposed -> (3H, H)
        "user_emb_map_w": bound * jax.random.uniform(
            k3, (3 * hidden_dim, hidden_dim), jnp.float32, -1.0, 1.0),
        "user_emb_map_b": bound * jax.random.uniform(
            k4, (hidden_dim,), jnp.float32, -1.0, 1.0),
    }


def prepare_graph(g):
    """Cast a (normalized, dense) adjacency to bf16 ONCE, outside the jitted forward."""
    return g.astype(jnp.bfloat16)


def encoder_forward(params, ui_graph, uu_graph, num_users, num_items,
                    n_layers=2, train=True, temp_flag=False):
    user_emb_ego = params["user_emb_ego"]
    item_emb_ego = params["item_emb_ego"]

    # Graphs are expected pre-cast to bf16 (prepare_graph); only cast as a fallback
    # so per-call N^2 cast traffic is not paid on the hot path.
    ui_g = ui_graph if ui_graph.dtype == jnp.bfloat16 else ui_graph.astype(jnp.bfloat16)
    uu_g = uu_graph if uu_graph.dtype == jnp.bfloat16 else uu_graph.astype(jnp.bfloat16)

    all_emb = jnp.concatenate([user_emb_ego, item_emb_ego], axis=0)
    all_emb = propagation(ui_g, all_emb, n_layers)

    user_emb = all_emb[:num_users]
    item_emb = all_emb[num_users:num_users + num_items]

    user_uu_emb = propagation(uu_g, user_emb, 1)

    # user_emb_map(concat([ego, user_emb, user_uu_emb], -1)) without the concat.
    user_final_emb = fused_linear3(
        user_emb_ego, user_emb, user_uu_emb,
        params["user_emb_map_w"], params["user_emb_map_b"],
    )

    if train:
        return (user_final_emb, item_emb, user_emb_ego, item_emb_ego)
    elif temp_flag:
        return (user_final_emb, item_emb, user_emb_ego)
    else:
        return (user_final_emb, item_emb)


# ---------------------------------------------------------------------------
# Pure-JAX reference (same bf16 casting) for a correctness check
# ---------------------------------------------------------------------------
def _ref_forward(params, ui_graph, uu_graph, num_users, num_items, n_layers):
    def prop_ref(g, e, layers):
        g = g.astype(jnp.bfloat16)
        acc = e.astype(jnp.float32)
        cur = e.astype(jnp.bfloat16)
        for _ in range(layers):
            nxt = jnp.dot(g, cur, preferred_element_type=jnp.float32)
            acc = acc + nxt
            cur = nxt.astype(jnp.bfloat16)
        return acc / (layers + 1)

    ue, ie = params["user_emb_ego"], params["item_emb_ego"]
    all_emb = prop_ref(ui_graph, jnp.concatenate([ue, ie], axis=0), n_layers)
    user_emb = all_emb[:num_users]
    item_emb = all_emb[num_users:num_users + num_items]
    uu_emb = prop_ref(uu_graph, user_emb, 1)
    cat = jnp.concatenate([ue, user_emb, uu_emb], axis=-1).astype(jnp.bfloat16)
    w = params["user_emb_map_w"].astype(jnp.bfloat16)
    final = jnp.dot(cat, w, preferred_element_type=jnp.float32) + params["user_emb_map_b"]
    return final, item_emb


# ---------------------------------------------------------------------------
# Deterministic synthetic inputs
# ---------------------------------------------------------------------------
def _sym_normalize(adj):
    deg = jnp.sum(adj, axis=1) + 1e-8
    d_inv_sqrt = 1.0 / jnp.sqrt(deg)
    return adj * d_inv_sqrt[:, None] * d_inv_sqrt[None, :]


def make_graphs(key, num_users, num_items):
    k1, k2 = jax.random.split(key)
    # bipartite user-item interaction matrix
    r = (jax.random.uniform(k1, (num_users, num_items)) < 0.1).astype(jnp.float32)
    n = num_users + num_items
    ui = jnp.zeros((n, n), jnp.float32)
    ui = ui.at[:num_users, num_users:].set(r)
    ui = ui.at[num_users:, :num_users].set(r.T)
    ui_graph = _sym_normalize(ui)

    # symmetric user-user graph
    a = (jax.random.uniform(k2, (num_users, num_users)) < 0.1).astype(jnp.float32)
    a = jnp.maximum(a, a.T)
    uu_graph = _sym_normalize(a)
    return ui_graph, uu_graph


if __name__ == "__main__":
    num_users, num_items, hidden_dim, n_layers = 64, 64, 128, 2

    root = jax.random.PRNGKey(0)
    k_params, k_graphs = jax.random.split(root)

    params = init_encoder_params(k_params, num_users, num_items, hidden_dim)
    ui_graph_f32, uu_graph_f32 = make_graphs(k_graphs, num_users, num_items)

    # One-time bf16 graph preparation, OUTSIDE the jitted forward (hot-path byte savings).
    ui_graph = prepare_graph(ui_graph_f32)
    uu_graph = prepare_graph(uu_graph_f32)

    fwd = jax.jit(
        lambda p, g1, g2: encoder_forward(
            p, g1, g2, num_users, num_items, n_layers=n_layers, train=True
        )
    )
    user_final_emb, item_emb, user_emb_ego, item_emb_ego = fwd(
        params, ui_graph, uu_graph
    )
    jax.block_until_ready((user_final_emb, item_emb, user_emb_ego, item_emb_ego))

    assert user_final_emb.shape == (num_users, hidden_dim)
    assert item_emb.shape == (num_items, hidden_dim)
    assert user_emb_ego.shape == (num_users, hidden_dim)
    assert item_emb_ego.shape == (num_items, hidden_dim)

    # Correctness check against a dtype-matched pure-JAX reference.
    ref_final, ref_item = _ref_forward(
        params, ui_graph_f32, uu_graph_f32, num_users, num_items, n_layers
    )
    np.testing.assert_allclose(np.asarray(user_final_emb), np.asarray(ref_final),
                               rtol=1e-2, atol=1e-2)
    np.testing.assert_allclose(np.asarray(item_emb), np.asarray(ref_item),
                               rtol=1e-2, atol=1e-2)

    print("KERNEL_OK")
</pallas_src>

<mosaic_0001>
module attributes {stable_mosaic.version = 11 : i64} {
  func.func @_prop_step_kernel(%arg0: i32, %arg1: i32, %arg2: memref<128x128xbf16, #tpu.memory_space<vmem>>, %arg3: memref<128x128xbf16, #tpu.memory_space<vmem>>, %arg4: memref<128x128xf32, #tpu.memory_space<vmem>>, %arg5: memref<128x128xbf16, #tpu.memory_space<vmem>>, %arg6: memref<128x128xf32, #tpu.memory_space<vmem>>, %arg7: memref<128x128xf32, #tpu.memory_space<vmem>>) attributes {dimension_semantics = [#tpu.dimension_semantics<parallel>, #tpu.dimension_semantics<arbitrary>], iteration_bounds = array<i64: 1, 1>, scalar_prefetch = 0 : i64, scratch_operands = 1 : i64, tpu.core_type = #tpu.core_type<tc>, window_params = [{transform_indices = @transform_0, window_bounds = array<i64: 128, 128>}, {transform_indices = @transform_1, window_bounds = array<i64: 128, 128>}, {transform_indices = @transform_2, window_bounds = array<i64: 128, 128>}, {transform_indices = @transform_3, window_bounds = array<i64: 128, 128>}, {transform_indices = @transform_4, window_bounds = array<i64: 128, 128>}]} {
    %c0_i32 = arith.constant 0 : i32
    %0 = arith.cmpi eq, %arg1, %c0_i32 : i32
    %1 = arith.extui %0 : i1 to i32
    %c0_i32_0 = arith.constant 0 : i32
    %2 = arith.cmpi ne, %1, %c0_i32_0 : i32
    scf.if %2 {
      %cst_10 = arith.constant 0.000000e+00 : f32
      %12 = vector.broadcast %cst_10 : f32 to vector<128x128xf32>
      %c0_11 = arith.constant 0 : index
      %c0_12 = arith.constant 0 : index
      %13 = vector.load %arg7[%c0_11, %c0_12] : memref<128x128xf32, #tpu.memory_space<vmem>>, vector<128x128xf32>
      tpu.vector_store %arg7[%c0_11, %c0_12], %12 {strides = array<i32>} : memref<128x128xf32, #tpu.memory_space<vmem>>, vector<128x128xf32>,
    } else {
    }
    %c0 = arith.constant 0 : index
    %c0_1 = arith.constant 0 : index
    %3 = vector.load %arg3[%c0, %c0_1] : memref<128x128xbf16, #tpu.memory_space<vmem>>, vector<128x128xbf16>
    %c0_2 = arith.constant 0 : index
    %c0_3 = arith.constant 0 : index
    %4 = vector.load %arg7[%c0_2, %c0_3] : memref<128x128xf32, #tpu.memory_space<vmem>>, vector<128x128xf32>
    %c0_4 = arith.constant 0 : index
    %c0_5 = arith.constant 0 : index
    %5 = vector.load %arg2[%c0_4, %c0_5] : memref<128x128xbf16, #tpu.memory_space<vmem>>, vector<128x128xbf16>
    %cst = arith.constant dense<0.000000e+00> : vector<128x128xf32>
    %6 = tpu.matmul %5, %3, %cst {dimension_numbers = #tpu.dot_dimension_numbers<[1], [0], [0], [1], [0, 0, 1, 1], [], []>} : vector<128x128xbf16>, vector<128x128xbf16>, vector<128x128xf32> -> vector<128x128xf32>
    %7 = arith.addf %4, %6 : vector<128x128xf32>
    %c0_6 = arith.constant 0 : index
    %c0_7 = arith.constant 0 : index
    %8 = vector.load %arg7[%c0_6, %c0_7] : memref<128x128xf32, #tpu.memory_space<vmem>>, vector<128x128xf32>
    tpu.vector_store %arg7[%c0_6, %c0_7], %7 {strides = array<i32>} : memref<128x128xf32, #tpu.memory_space<vmem>>, vector<128x128xf32>,
    %c0_i32_8 = arith.constant 0 : i32
    %9 = arith.cmpi eq, %arg1, %c0_i32_8 : i32
    %10 = arith.extui %9 : i1 to i32
    %c0_i32_9 = arith.constant 0 : i32
    %11 = arith.cmpi ne, %10, %c0_i32_9 : i32
    scf.if %11 {
      %c0_10 = arith.constant 0 : index
      %c0_11 = arith.constant 0 : index
      %12 = vector.load %arg7[%c0_10, %c0_11] : memref<128x128xf32, #tpu.memory_space<vmem>>, vector<128x128xf32>
      %13 = arith.truncf %12 : vector<128x128xf32> to vector<128x128xbf16>
      %c0_12 = arith.constant 0 : index
      %c0_13 = arith.constant 0 : index
      %14 = vector.load %arg5[%c0_12, %c0_13] : memref<128x128xbf16, #tpu.memory_space<vmem>>, vector<128x128xbf16>
      tpu.vector_store %arg5[%c0_12, %c0_13], %13 {strides = array<i32>} : memref<128x128xbf16, #tpu.memory_space<vmem>>, vector<128x128xbf16>,
      %c0_14 = arith.constant 0 : index
      %c0_15 = arith.constant 0 : index
      %15 = vector.load %arg4[%c0_14, %c0_15] : memref<128x128xf32, #tpu.memory_space<vmem>>, vector<128x128xf32>
      %c0_16 = arith.constant 0 : index
      %c0_17 = arith.constant 0 : index
      %16 = vector.load %arg7[%c0_16, %c0_17] : memref<128x128xf32, #tpu.memory_space<vmem>>, vector<128x128xf32>
      %17 = arith.addf %15, %16 : vector<128x128xf32>
      %cst_18 = arith.constant 1.000000e+00 : f32
      %18 = vector.broadcast %cst_18 : f32 to vector<128x128xf32>
      %19 = arith.mulf %17, %18 : vector<128x128xf32>
      %c0_19 = arith.constant 0 : index
      %c0_20 = arith.constant 0 : index
      %20 = vector.load %arg6[%c0_19, %c0_20] : memref<128x128xf32, #tpu.memory_space<vmem>>, vector<128x128xf32>
      tpu.vector_store %arg6[%c0_19, %c0_20], %19 {strides = array<i32>} : memref<128x128xf32, #tpu.memory_space<vmem>>, vector<128x128xf32>,
    } else {
    }
    return
  }
  func.func @transform_0(%arg0: i32, %arg1: i32) -> (i32, i32) {
    %c0_i32 = arith.constant 0 : i32
    return %arg0, %arg1 : i32, i32
  }
  func.func @transform_1(%arg0: i32, %arg1: i32) -> (i32, i32) {
    %c0_i32 = arith.constant 0 : i32
    %c0_i32_0 = arith.constant 0 : i32
    return %arg1, %c0_i32 : i32, i32
  }
  func.func @transform_2(%arg0: i32, %arg1: i32) -> (i32, i32) {
    %c0_i32 = arith.constant 0 : i32
    %c0_i32_0 = arith.constant 0 : i32
    return %arg0, %c0_i32 : i32, i32
  }
  func.func @transform_3(%arg0: i32, %arg1: i32) -> (i32, i32) {
    %c0_i32 = arith.constant 0 : i32
    %c0_i32_0 = arith.constant 0 : i32
    return %arg0, %c0_i32 : i32, i32
  }
  func.func @transform_4(%arg0: i32, %arg1: i32) -> (i32, i32) {
    %c0_i32 = arith.constant 0 : i32
    %c0_i32_0 = arith.constant 0 : i32
    return %arg0, %c0_i32 : i32, i32
  }
}

module attributes {stable_mosaic.version = 11 : i64} {
  func.func @_prop_step_kernel(%arg0: i32, %arg1: i32, %arg2: memref<128x128xbf16, #tpu.memory_space<vmem>>, %arg3: memref<128x128xbf16, #tpu.memory_space<vmem>>, %arg4: memref<128x128xf32, #tpu.memory_space<vmem>>, %arg5: memref<128x128xf32, #tpu.memory_space<vmem>>, %arg6: memref<128x128xf32, #tpu.memory_space<vmem>>) attributes {dimension_semantics = [#tpu.dimension_semantics<parallel>, #tpu.dimension_semantics<arbitrary>], iteration_bounds = array<i64: 1, 1>, scalar_prefetch = 0 : i64, scratch_operands = 1 : i64, tpu.core_type = #tpu.core_type<tc>, window_params = [{transform_indices = @transform_0, window_bounds = array<i64: 128, 128>}, {transform_indices = @transform_1, window_bounds = array<i64: 128, 128>}, {transform_indices = @transform_2, window_bounds = array<i64: 128, 128>}, {transform_indices = @transform_3, window_bounds = array<i64: 128, 128>}]} {
    %c0_i32 = arith.constant 0 : i32
    %0 = arith.cmpi eq, %arg1, %c0_i32 : i32
    %1 = arith.extui %0 : i1 to i32
    %c0_i32_0 = arith.constant 0 : i32
    %2 = arith.cmpi ne, %1, %c0_i32_0 : i32
    scf.if %2 {
      %cst_10 = arith.constant 0.000000e+00 : f32
      %12 = vector.broadcast %cst_10 : f32 to vector<128x128xf32>
      %c0_11 = arith.constant 0 : index
      %c0_12 = arith.constant 0 : index
      %13 = vector.load %arg6[%c0_11, %c0_12] : memref<128x128xf32, #tpu.memory_space<vmem>>, vector<128x128xf32>
      tpu.vector_store %arg6[%c0_11, %c0_12], %12 {strides = array<i32>} : memref<128x128xf32, #tpu.memory_space<vmem>>, vector<128x128xf32>,
    } else {
    }
    %c0 = arith.constant 0 : index
    %c0_1 = arith.constant 0 : index
    %3 = vector.load %arg3[%c0, %c0_1] : memref<128x128xbf16, #tpu.memory_space<vmem>>, vector<128x128xbf16>
    %c0_2 = arith.constant 0 : index
    %c0_3 = arith.constant 0 : index
    %4 = vector.load %arg6[%c0_2, %c0_3] : memref<128x128xf32, #tpu.memory_space<vmem>>, vector<128x128xf32>
    %c0_4 = arith.constant 0 : index
    %c0_5 = arith.constant 0 : index
    %5 = vector.load %arg2[%c0_4, %c0_5] : memref<128x128xbf16, #tpu.memory_space<vmem>>, vector<128x128xbf16>
    %cst = arith.constant dense<0.000000e+00> : vector<128x128xf32>
    %6 = tpu.matmul %5, %3, %cst {dimension_numbers = #tpu.dot_dimension_numbers<[1], [0], [0], [1], [0, 0, 1, 1], [], []>} : vector<128x128xbf16>, vector<128x128xbf16>, vector<128x128xf32> -> vector<128x128xf32>
    %7 = arith.addf %4, %6 : vector<128x128xf32>
    %c0_6 = arith.constant 0 : index
    %c0_7 = arith.constant 0 : index
    %8 = vector.load %arg6[%c0_6, %c0_7] : memref<128x128xf32, #tpu.memory_space<vmem>>, vector<128x128xf32>
    tpu.vector_store %arg6[%c0_6, %c0_7], %7 {strides = array<i32>} : memref<128x128xf32, #tpu.memory_space<vmem>>, vector<128x128xf32>,
    %c0_i32_8 = arith.constant 0 : i32
    %9 = arith.cmpi eq, %arg1, %c0_i32_8 : i32
    %10 = arith.extui %9 : i1 to i32
    %c0_i32_9 = arith.constant 0 : i32
    %11 = arith.cmpi ne, %10, %c0_i32_9 : i32
    scf.if %11 {
      %c0_10 = arith.constant 0 : index
      %c0_11 = arith.constant 0 : index
      %12 = vector.load %arg4[%c0_10, %c0_11] : memref<128x128xf32, #tpu.memory_space<vmem>>, vector<128x128xf32>
      %c0_12 = arith.constant 0 : index
      %c0_13 = arith.constant 0 : index
      %13 = vector.load %arg6[%c0_12, %c0_13] : memref<128x128xf32, #tpu.memory_space<vmem>>, vector<128x128xf32>
      %14 = arith.addf %12, %13 : vector<128x128xf32>
      %cst_14 = arith.constant 0.333333343 : f32
      %15 = vector.broadcast %cst_14 : f32 to vector<128x128xf32>
      %16 = arith.mulf %14, %15 : vector<128x128xf32>
      %c0_15 = arith.constant 0 : index
      %c0_16 = arith.constant 0 : index
      %17 = vector.load %arg5[%c0_15, %c0_16] : memref<128x128xf32, #tpu.memory_space<vmem>>, vector<128x128xf32>
      tpu.vector_store %arg5[%c0_15, %c0_16], %16 {strides = array<i32>} : memref<128x128xf32, #tpu.memory_space<vmem>>, vector<128x128xf32>,
    } else {
    }
    return
  }
  func.func @transform_0(%arg0: i32, %arg1: i32) -> (i32, i32) {
    %c0_i32 = arith.constant 0 : i32
    return %arg0, %arg1 : i32, i32
  }
  func.func @transform_1(%arg0: i32, %arg1: i32) -> (i32, i32) {
    %c0_i32 = arith.constant 0 : i32
    %c0_i32_0 = arith.constant 0 : i32
    return %arg1, %c0_i32 : i32, i32
  }
  func.func @transform_2(%arg0: i32, %arg1: i32) -> (i32, i32) {
    %c0_i32 = arith.constant 0 : i32
    %c0_i32_0 = arith.constant 0 : i32
    return %arg0, %c0_i32 : i32, i32
  }
  func.func @transform_3(%arg0: i32, %arg1: i32) -> (i32, i32) {
    %c0_i32 = arith.constant 0 : i32
    %c0_i32_0 = arith.constant 0 : i32
    return %arg0, %c0_i32 : i32, i32
  }
}

module attributes {stable_mosaic.version = 11 : i64} {
  func.func @_prop_step_kernel(%arg0: i32, %arg1: i32, %arg2: memref<64x64xbf16, #tpu.memory_space<vmem>>, %arg3: memref<64x128xbf16, #tpu.memory_space<vmem>>, %arg4: memref<64x128xf32, #tpu.memory_space<vmem>>, %arg5: memref<64x128xf32, #tpu.memory_space<vmem>>, %arg6: memref<64x128xf32, #tpu.memory_space<vmem>>) attributes {dimension_semantics = [#tpu.dimension_semantics<parallel>, #tpu.dimension_semantics<arbitrary>], iteration_bounds = array<i64: 1, 1>, scalar_prefetch = 0 : i64, scratch_operands = 1 : i64, tpu.core_type = #tpu.core_type<tc>, window_params = [{transform_indices = @transform_0, window_bounds = array<i64: 64, 64>}, {transform_indices = @transform_1, window_bounds = array<i64: 64, 128>}, {transform_indices = @transform_2, window_bounds = array<i64: 64, 128>}, {transform_indices = @transform_3, window_bounds = array<i64: 64, 128>}]} {
    %c0_i32 = arith.constant 0 : i32
    %0 = arith.cmpi eq, %arg1, %c0_i32 : i32
    %1 = arith.extui %0 : i1 to i32
    %c0_i32_0 = arith.constant 0 : i32
    %2 = arith.cmpi ne, %1, %c0_i32_0 : i32
    scf.if %2 {
      %cst_10 = arith.constant 0.000000e+00 : f32
      %12 = vector.broadcast %cst_10 : f32 to vector<64x128xf32>
      %c0_11 = arith.constant 0 : index
      %c0_12 = arith.constant 0 : index
      %13 = vector.load %arg6[%c0_11, %c0_12] : memref<64x128xf32, #tpu.memory_space<vmem>>, vector<64x128xf32>
      tpu.vector_store %arg6[%c0_11, %c0_12], %12 {strides = array<i32>} : memref<64x128xf32, #tpu.memory_space<vmem>>, vector<64x128xf32>,
    } else {
    }
    %c0 = arith.constant 0 : index
    %c0_1 = arith.constant 0 : index
    %3 = vector.load %arg3[%c0, %c0_1] : memref<64x128xbf16, #tpu.memory_space<vmem>>, vector<64x128xbf16>
    %c0_2 = arith.constant 0 : index
    %c0_3 = arith.constant 0 : index
    %4 = vector.load %arg6[%c0_2, %c0_3] : memref<64x128xf32, #tpu.memory_space<vmem>>, vector<64x128xf32>
    %c0_4 = arith.constant 0 : index
    %c0_5 = arith.constant 0 : index
    %5 = vector.load %arg2[%c0_4, %c0_5] : memref<64x64xbf16, #tpu.memory_space<vmem>>, vector<64x64xbf16>
    %cst = arith.constant dense<0.000000e+00> : vector<64x128xf32>
    %6 = tpu.matmul %5, %3, %cst {dimension_numbers = #tpu.dot_dimension_numbers<[1], [0], [0], [1], [0, 0, 1, 1], [], []>} : vector<64x64xbf16>, vector<64x128xbf16>, vector<64x128xf32> -> vector<64x128xf32>
    %7 = arith.addf %4, %6 : vector<64x128xf32>
    %c0_6 = arith.constant 0 : index
    %c0_7 = arith.constant 0 : index
    %8 = vector.load %arg6[%c0_6, %c0_7] : memref<64x128xf32, #tpu.memory_space<vmem>>, vector<64x128xf32>
    tpu.vector_store %arg6[%c0_6, %c0_7], %7 {strides = array<i32>} : memref<64x128xf32, #tpu.memory_space<vmem>>, vector<64x128xf32>,
    %c0_i32_8 = arith.constant 0 : i32
    %9 = arith.cmpi eq, %arg1, %c0_i32_8 : i32
    %10 = arith.extui %9 : i1 to i32
    %c0_i32_9 = arith.constant 0 : i32
    %11 = arith.cmpi ne, %10, %c0_i32_9 : i32
    scf.if %11 {
      %c0_10 = arith.constant 0 : index
      %c0_11 = arith.constant 0 : index
      %12 = vector.load %arg4[%c0_10, %c0_11] : memref<64x128xf32, #tpu.memory_space<vmem>>, vector<64x128xf32>
      %c0_12 = arith.constant 0 : index
      %c0_13 = arith.constant 0 : index
      %13 = vector.load %arg6[%c0_12, %c0_13] : memref<64x128xf32, #tpu.memory_space<vmem>>, vector<64x128xf32>
      %14 = arith.addf %12, %13 : vector<64x128xf32>
      %cst_14 = arith.constant 5.000000e-01 : f32
      %15 = vector.broadcast %cst_14 : f32 to vector<64x128xf32>
      %16 = arith.mulf %14, %15 : vector<64x128xf32>
      %c0_15 = arith.constant 0 : index
      %c0_16 = arith.constant 0 : index
      %17 = vector.load %arg5[%c0_15, %c0_16] : memref<64x128xf32, #tpu.memory_space<vmem>>, vector<64x128xf32>
      tpu.vector_store %arg5[%c0_15, %c0_16], %16 {strides = array<i32>} : memref<64x128xf32, #tpu.memory_space<vmem>>, vector<64x128xf32>,
    } else {
    }
    return
  }
  func.func @transform_0(%arg0: i32, %arg1: i32) -> (i32, i32) {
    %c0_i32 = arith.constant 0 : i32
    return %arg0, %arg1 : i32, i32
  }
  func.func @transform_1(%arg0: i32, %arg1: i32) -> (i32, i32) {
    %c0_i32 = arith.constant 0 : i32
    %c0_i32_0 = arith.constant 0 : i32
    return %arg1, %c0_i32 : i32, i32
  }
  func.func @transform_2(%arg0: i32, %arg1: i32) -> (i32, i32) {
    %c0_i32 = arith.constant 0 : i32
    %c0_i32_0 = arith.constant 0 : i32
    return %arg0, %c0_i32 : i32, i32
  }
  func.func @transform_3(%arg0: i32, %arg1: i32) -> (i32, i32) {
    %c0_i32 = arith.constant 0 : i32
    %c0_i32_0 = arith.constant 0 : i32
    return %arg0, %c0_i32 : i32, i32
  }
}

module attributes {stable_mosaic.version = 11 : i64} {
  func.func @_fused_linear3_kernel(%arg0: i32, %arg1: memref<64x128xf32, #tpu.memory_space<vmem>>, %arg2: memref<64x128xf32, #tpu.memory_space<vmem>>, %arg3: memref<64x128xf32, #tpu.memory_space<vmem>>, %arg4: memref<384x128xf32, #tpu.memory_space<vmem>>, %arg5: memref<1x128xf32, #tpu.memory_space<vmem>>, %arg6: memref<64x128xf32, #tpu.memory_space<vmem>>) attributes {dimension_semantics = [#tpu.dimension_semantics<parallel>], iteration_bounds = array<i64: 1>, scalar_prefetch = 0 : i64, scratch_operands = 0 : i64, tpu.core_type = #tpu.core_type<tc>, window_params = [{transform_indices = @transform_0, window_bounds = array<i64: 64, 128>}, {transform_indices = @transform_1, window_bounds = array<i64: 64, 128>}, {transform_indices = @transform_2, window_bounds = array<i64: 64, 128>}, {pipeline_mode = #tpu.pipeline_mode<synchronous>, transform_indices = @transform_3, window_bounds = array<i64: 384, 128>}, {pipeline_mode = #tpu.pipeline_mode<synchronous>, transform_indices = @transform_4, window_bounds = array<i64: 1, 128>}, {transform_indices = @transform_5, window_bounds = array<i64: 64, 128>}]} {
    %c0 = arith.constant 0 : index
    %c0_0 = arith.constant 0 : index
    %0 = vector.load %arg4[%c0, %c0_0] : memref<384x128xf32, #tpu.memory_space<vmem>>, vector<384x128xf32>
    %1 = arith.truncf %0 : vector<384x128xf32> to vector<384x128xbf16>
    %c0_1 = arith.constant 0 : index
    %c0_2 = arith.constant 0 : index
    %2 = vector.load %arg1[%c0_1, %c0_2] : memref<64x128xf32, #tpu.memory_space<vmem>>, vector<64x128xf32>
    %3 = arith.truncf %2 : vector<64x128xf32> to vector<64x128xbf16>
    %4 = vector.extract_strided_slice %1 {offsets = [0, 0], sizes = [128, 128], strides = [1, 1]} : vector<384x128xbf16> to vector<128x128xbf16>
    %cst = arith.constant dense<0.000000e+00> : vector<64x128xf32>
    %5 = tpu.matmul %3, %4, %cst {dimension_numbers = #tpu.dot_dimension_numbers<[1], [0], [0], [1], [0, 0, 1, 1], [], []>} : vector<64x128xbf16>, vector<128x128xbf16>, vector<64x128xf32> -> vector<64x128xf32>
    %c0_3 = arith.constant 0 : index
    %c0_4 = arith.constant 0 : index
    %6 = vector.load %arg2[%c0_3, %c0_4] : memref<64x128xf32, #tpu.memory_space<vmem>>, vector<64x128xf32>
    %7 = arith.truncf %6 : vector<64x128xf32> to vector<64x128xbf16>
    %8 = vector.extract_strided_slice %1 {offsets = [128, 0], sizes = [128, 128], strides = [1, 1]} : vector<384x128xbf16> to vector<128x128xbf16>
    %cst_5 = arith.constant dense<0.000000e+00> : vector<64x128xf32>
    %9 = tpu.matmul %7, %8, %cst_5 {dimension_numbers = #tpu.dot_dimension_numbers<[1], [0], [0], [1], [0, 0, 1, 1], [], []>} : vector<64x128xbf16>, vector<128x128xbf16>, vector<64x128xf32> -> vector<64x128xf32>
    %10 = arith.addf %5, %9 : vector<64x128xf32>
    %c0_6 = arith.constant 0 : index
    %c0_7 = arith.constant 0 : index
    %11 = vector.load %arg3[%c0_6, %c0_7] : memref<64x128xf32, #tpu.memory_space<vmem>>, vector<64x128xf32>
    %12 = arith.truncf %11 : vector<64x128xf32> to vector<64x128xbf16>
    %13 = vector.extract_strided_slice %1 {offsets = [256, 0], sizes = [128, 128], strides = [1, 1]} : vector<384x128xbf16> to vector<128x128xbf16>
    %cst_8 = arith.constant dense<0.000000e+00> : vector<64x128xf32>
    %14 = tpu.matmul %12, %13, %cst_8 {dimension_numbers = #tpu.dot_dimension_numbers<[1], [0], [0], [1], [0, 0, 1, 1], [], []>} : vector<64x128xbf16>, vector<128x128xbf16>, vector<64x128xf32> -> vector<64x128xf32>
    %15 = arith.addf %10, %14 : vector<64x128xf32>
    %c0_9 = arith.constant 0 : index
    %c0_10 = arith.constant 0 : index
    %16 = vector.load %arg5[%c0_9, %c0_10] : memref<1x128xf32, #tpu.memory_space<vmem>>, vector<1x128xf32>
    %17 = vector.broadcast %16 : vector<1x128xf32> to vector<64x128xf32>
    %18 = arith.addf %15, %17 : vector<64x128xf32>
    %c0_11 = arith.constant 0 : index
    %c0_12 = arith.constant 0 : index
    %19 = vector.load %arg6[%c0_11, %c0_12] : memref<64x128xf32, #tpu.memory_space<vmem>>, vector<64x128xf32>
    tpu.vector_store %arg6[%c0_11, %c0_12], %18 {strides = array<i32>} : memref<64x128xf32, #tpu.memory_space<vmem>>, vector<64x128xf32>,
    return
  }
  func.func @transform_0(%arg0: i32) -> (i32, i32) {
    %c0_i32 = arith.constant 0 : i32
    %c0_i32_0 = arith.constant 0 : i32
    return %arg0, %c0_i32 : i32, i32
  }
  func.func @transform_1(%arg0: i32) -> (i32, i32) {
    %c0_i32 = arith.constant 0 : i32
    %c0_i32_0 = arith.constant 0 : i32
    return %arg0, %c0_i32 : i32, i32
  }
  func.func @transform_2(%arg0: i32) -> (i32, i32) {
    %c0_i32 = arith.constant 0 : i32
    %c0_i32_0 = arith.constant 0 : i32
    return %arg0, %c0_i32 : i32, i32
  }
  func.func @transform_3(%arg0: i32) -> (i32, i32) {
    %c0_i32 = arith.constant 0 : i32
    %c0_i32_0 = arith.constant 0 : i32
    %c0_i32_1 = arith.constant 0 : i32
    return %c0_i32, %c0_i32_0 : i32, i32
  }
  func.func @transform_4(%arg0: i32) -> (i32, i32) {
    %c0_i32 = arith.constant 0 : i32
    %c0_i32_0 = arith.constant 0 : i32
    %c0_i32_1 = arith.constant 0 : i32
    return %c0_i32, %c0_i32_0 : i32, i32
  }
  func.func @transform_5(%arg0: i32) -> (i32, i32) {
    %c0_i32 = arith.constant 0 : i32
    %c0_i32_0 = arith.constant 0 : i32
    return %arg0, %c0_i32 : i32, i32
  }
}

</mosaic_0001>

<llo_original>
// kernel: _lambda_.4
$region0: #{_lambda_.4}
  #allocation0 [shape = 'u32[]', space=smem, size = 0x4, offset = 0x4, fixed_abs, tag = 'smem constant byte address 0x4 - core index']
  #allocation1 [shape = 'u32[144,128]{1,0:T(1,128)}', space=vmem, size = 0x12000, scoped, tag = 'internal scratch']
  #allocation2 [shape = 'f32[128,128]{1,0:T(8,128)}', space=vmem, size = 0x10000, scoped, tag = 'scratch operand']
  %s0 = inlined_call_operand.vmem [shape: bf16[128,128], index: 0, kind: input, shape index: {}]
  %s1 = inlined_call_operand.vmem [shape: bf16[128,128], index: 1, kind: input, shape index: {}]
  %s2 = inlined_call_operand.vmem [shape: f32[128,128], index: 2, kind: input, shape index: {}, may-alias: {2,4}]
  %s3 = inlined_call_operand.vmem [shape: bf16[128,128], index: 3, kind: output, shape index: {0}]
  %s4 = inlined_call_operand.vmem [shape: f32[128,128], index: 4, kind: output, shape index: {1}, may-alias: {2,4}]
  %5 = xla_tuple %s3, %s4
  %s6 = sld [smem:[#allocation0]]
  $region38: #{_lambda_.4} parent=0
    _
  %s8 = ssub.s32 1, %s6
  %s9 = scalar_select 0, %s8, %s6
  // Predicated region
  $region2: #{_lambda_.4} parent=0 // pred_check
    _
  $region3: #{_lambda_.4} parent=0 // pred_check_branch
    %11 = sbr.rel (0) target = $region5
  $region4: #{_lambda_.4} parent=0 // pred_region
    _
  $region5: #{_lambda_.4} parent=0 // pred_fallthru
    _
  // Predicated region
  $region6: #{_lambda_.4} parent=0 // pred_check
    _
  $region7: #{_lambda_.4} parent=0 // pred_check_branch
    %13 = sbr.rel (0) target = $region9
  $region8: #{_lambda_.4} parent=0 // pred_region
    _
  $region9: #{_lambda_.4} parent=0 // pred_fallthru
    _
  // Predicated region
  $region10: #{_lambda_.4} parent=0 // pred_check
    _
  $region11: #{_lambda_.4} parent=0 // pred_check_branch
    %15 = sbr.rel (0) target = $region13
  $region12: #{_lambda_.4} parent=0 // pred_region
    _
  $region13: #{_lambda_.4} parent=0 // pred_fallthru
    _
  %p17 = scmp.eq.s32.totalorder 0, 0
  // Predicated region
  $region14: #{_lambda_.4} parent=0 // pred_check
    %p18 = pneg %p17
  $region15: #{_lambda_.4} parent=0 // pred_check_branch
    %20 = sbr.rel (%p18) target = $region17
  $region16: #{_lambda_.4} parent=0 // pred_region
    %21 = vst [vmem:[#allocation2] sm:$0xff] 0.0
    %22 = vst [vmem:[#allocation2 + $0x8] sm:$0xff] 0.0
    %23 = vst [vmem:[#allocation2 + $0x10] sm:$0xff] 0.0
    %24 = vst [vmem:[#allocation2 + $0x18] sm:$0xff] 0.0
    %25 = vst [vmem:[#allocation2 + $0x20] sm:$0xff] 0.0
    %26 = vst [vmem:[#allocation2 + $0x28] sm:$0xff] 0.0
    %27 = vst [vmem:[#allocation2 + $0x30] sm:$0xff] 0.0
    %28 = vst [vmem:[#allocation2 + $0x38] sm:$0xff] 0.0
    %29 = vst [vmem:[#allocation2 + $0x40] sm:$0xff] 0.0
    %30 = vst [vmem:[#allocation2 + $0x48] sm:$0xff] 0.0
    %31 = vst [vmem:[#allocation2 + $0x50] sm:$0xff] 0.0
    %32 = vst [vmem:[#allocation2 + $0x58] sm:$0xff] 0.0
    %33 = vst [vmem:[#allocation2 + $0x60] sm:$0xff] 0.0
    %34 = vst [vmem:[#allocation2 + $0x68] sm:$0xff] 0.0
    %35 = vst [vmem:[#allocation2 + $0x70] sm:$0xff] 0.0
    %36 = vst [vmem:[#allocation2 + $0x78] sm:$0xff] 0.0
  $region17: #{_lambda_.4} parent=0 // pred_fallthru
    _
  %v37 = vld [vmem:[%s1] sm:$0xf]
  %v38 = vld [vmem:[%s1 + $0x4] sm:$0xf]
  %v39 = vld [vmem:[%s1 + $0x8] sm:$0xf]
  %v40 = vld [vmem:[%s1 + $0xc] sm:$0xf]
  %v41 = vld [vmem:[%s1 + $0x10] sm:$0xf]
  %v42 = vld [vmem:[%s1 + $0x14] sm:$0xf]
  %v43 = vld [vmem:[%s1 + $0x18] sm:$0xf]
  %v44 = vld [vmem:[%s1 + $0x1c] sm:$0xf]
  %v45 = vld [vmem:[%s1 + $0x20] sm:$0xf]
  %v46 = vld [vmem:[%s1 + $0x24] sm:$0xf]
  %v47 = vld [vmem:[%s1 + $0x28] sm:$0xf]
  %v48 = vld [vmem:[%s1 + $0x2c] sm:$0xf]
  %v49 = vld [vmem:[%s1 + $0x30] sm:$0xf]
  %v50 = vld [vmem:[%s1 + $0x34] sm:$0xf]
  %v51 = vld [vmem:[%s1 + $0x38] sm:$0xf]
  %v52 = vld [vmem:[%s1 + $0x3c] sm:$0xf]
  %v53 = vld [vmem:[#allocation2] sm:$0xff]
  %v54 = vld [vmem:[#allocation2 + $0x8] sm:$0xff]
  %v55 = vld [vmem:[#allocation2 + $0x10] sm:$0xff]
  %v56 = vld [vmem:[#allocation2 + $0x18] sm:$0xff]
  %v57 = vld [vmem:[#allocation2 + $0x20] sm:$0xff]
  %v58 = vld [vmem:[#allocation2 + $0x28] sm:$0xff]
  %v59 = vld [vmem:[#allocation2 + $0x30] sm:$0xff]
  %v60 = vld [vmem:[#allocation2 + $0x38] sm:$0xff]
  %v61 = vld [vmem:[#allocation2 + $0x40] sm:$0xff]
  %v62 = vld [vmem:[#allocation2 + $0x48] sm:$0xff]
  %v63 = vld [vmem:[#allocation2 + $0x50] sm:$0xff]
  %v64 = vld [vmem:[#allocation2 + $0x58] sm:$0xff]
  %v65 = vld [vmem:[#allocation2 + $0x60] sm:$0xff]
  %v66 = vld [vmem:[#allocation2 + $0x68] sm:$0xff]
  %v67 = vld [vmem:[#allocation2 + $0x70] sm:$0xff]
  %v68 = vld [vmem:[#allocation2 + $0x78] sm:$0xff]
  %v69 = vld [vmem:[%s0] sm:$0xf]
  %v70 = vld [vmem:[%s0 + $0x4] sm:$0xf]
  %v71 = vld [vmem:[%s0 + $0x8] sm:$0xf]
  %v72 = vld [vmem:[%s0 + $0xc] sm:$0xf]
  %v73 = vld [vmem:[%s0 + $0x10] sm:$0xf]
  %v74 = vld [vmem:[%s0 + $0x14] sm:$0xf]
  %v75 = vld [vmem:[%s0 + $0x18] sm:$0xf]
  %v76 = vld [vmem:[%s0 + $0x1c] sm:$0xf]
  %v77 = vld [vmem:[%s0 + $0x20] sm:$0xf]
  %v78 = vld [vmem:[%s0 + $0x24] sm:$0xf]
  %v79 = vld [vmem:[%s0 + $0x28] sm:$0xf]
  %v80 = vld [vmem:[%s0 + $0x2c] sm:$0xf]
  %v81 = vld [vmem:[%s0 + $0x30] sm:$0xf]
  %v82 = vld [vmem:[%s0 + $0x34] sm:$0xf]
  %v83 = vld [vmem:[%s0 + $0x38] sm:$0xf]
  %v84 = vld [vmem:[%s0 + $0x3c] sm:$0xf]
  %v101 = vunpack.c.l.b16 %v69
  %v102 = vunpack.c.l.b16 %v70
  %v103 = vunpack.c.l.b16 %v71
  %v104 = vunpack.c.l.b16 %v72
  %v105 = vunpack.c.l.b16 %v73
  %v106 = vunpack.c.l.b16 %v74
  %v107 = vunpack.c.l.b16 %v75
  %v108 = vunpack.c.l.b16 %v76
  %v109 = vunpack.c.l.b16 %v77
  %v110 = vunpack.c.l.b16 %v78
  %v111 = vunpack.c.l.b16 %v79
  %v112 = vunpack.c.l.b16 %v80
  %v113 = vunpack.c.l.b16 %v81
  %v114 = vunpack.c.l.b16 %v82
  %v115 = vunpack.c.l.b16 %v83
  %v116 = vunpack.c.l.b16 %v84
  %v117 = vpack.c.b16 %v102, %v101
  %v118 = vpack.c.b16 %v104, %v103
  %v119 = vpack.c.b16 %v106, %v105
  %v120 = vpack.c.b16 %v108, %v107
  %v121 = vpack.c.b16 %v110, %v109
  %v122 = vpack.c.b16 %v112, %v111
  %v123 = vpack.c.b16 %v114, %v113
  %v124 = vpack.c.b16 %v116, %v115
  %v149 = vunpack.c.l.b16 %v37
  %v150 = vunpack.c.l.b16 %v38
  %v151 = vunpack.c.l.b16 %v39
  %v152 = vunpack.c.l.b16 %v40
  %v153 = vunpack.c.l.b16 %v41
  %v154 = vunpack.c.l.b16 %v42
  %v155 = vunpack.c.l.b16 %v43
  %v156 = vunpack.c.l.b16 %v44
  %v157 = vunpack.c.l.b16 %v45
  %v158 = vunpack.c.l.b16 %v46
  %v159 = vunpack.c.l.b16 %v47
  %v160 = vunpack.c.l.b16 %v48
  %v161 = vunpack.c.l.b16 %v49
  %v162 = vunpack.c.l.b16 %v50
  %v163 = vunpack.c.l.b16 %v51
  %v164 = vunpack.c.l.b16 %v52
  %v165 = vpack.c.b16 %v150, %v149
  %v166 = vpack.c.b16 %v152, %v151
  %v167 = vpack.c.b16 %v154, %v153
  %v168 = vpack.c.b16 %v156, %v155
  %v169 = vpack.c.b16 %v158, %v157
  %v170 = vpack.c.b16 %v160, %v159
  %v171 = vpack.c.b16 %v162, %v161
  %v172 = vpack.c.b16 %v164, %v163
  %181 = vmatprep.subr.bf16.mxu0 0
  %182 = vmatpush1.bf16.msra.mxu0 %v165
  %183 = vmatprep.subr.bf16.mxu0 0
  %184 = vmatpush1.bf16.msra.mxu0 %v166
  %185 = vmatprep.subr.bf16.mxu0 0
  %186 = vmatpush1.bf16.msra.mxu0 %v167
  %187 = vmatprep.subr.bf16.mxu0 0
  %188 = vmatpush1.bf16.msra.mxu0 %v168
  %189 = vmatprep.subr.bf16.mxu0 0
  %190 = vmatpush1.bf16.msra.mxu0 %v169
  %191 = vmatprep.subr.bf16.mxu0 0
  %192 = vmatpush1.bf16.msra.mxu0 %v170
  %193 = vmatprep.subr.bf16.mxu0 0
  %194 = vmatpush1.bf16.msra.mxu0 %v171
  %195 = vmatprep.subr.bf16.mxu0 0
  %196 = vmatpush1.bf16.msra.mxu0 %v172
  %197 = vmatprep.subr.bf16.mxu0 0
  %198 = vmatpush1.bf16.msra.mxu0 0
  %199 = vmatprep.subr.bf16.mxu0 0
  %200 = vmatpush1.bf16.msra.mxu0 0
  %201 = vmatprep.subr.bf16.mxu0 0
  %202 = vmatpush1.bf16.msra.mxu0 0
  %203 = vmatprep.subr.bf16.mxu0 0
  %204 = vmatpush1.bf16.msra.mxu0 0
  %205 = vmatprep.subr.bf16.mxu0 0
  %206 = vmatpush1.bf16.msra.mxu0 0
  %207 = vmatprep.subr.bf16.mxu0 0
  %208 = vmatpush1.bf16.msra.mxu0 0
  %209 = vmatprep.subr.bf16.mxu0 0
  %210 = vmatpush1.bf16.msra.mxu0 0
  %211 = vmatprep.subr.bf16.mxu0 0
  %212 = vmatpush1.bf16.msra.mxu0 0
  %213 = vmatprep.mubr.bf16.mxu0 0
  %214 = vmatmul.mubr.bf16.gmra.mrb[0].mxu0 %v117
  %v215 = vpop.f32.mrb[0].mxu0
  %v216 = vadd.f32 0.0, %v215
  %v217 = vpop.f32.mrb[0].mxu0
  %v218 = vpop.f32.mrb[0].mxu0
  %v219 = vadd.f32 0.0, %v218
  %v220 = vpop.f32.mrb[0].mxu0
  %221 = vmatprep.mubr.bf16.mxu0 0
  %222 = vmatmul.mubr.bf16.gmra.mrb[0].mxu0 %v118
  %v223 = vpop.f32.mrb[0].mxu0
  %v224 = vadd.f32 0.0, %v223
  %v225 = vpop.f32.mrb[0].mxu0
  %v226 = vpop.f32.mrb[0].mxu0
  %v227 = vadd.f32 0.0, %v226
  %v228 = vpop.f32.mrb[0].mxu0
  %229 = vmatprep.mubr.bf16.mxu0 0
  %230 = vmatmul.mubr.bf16.gmra.mrb[0].mxu0 %v119
  %v231 = vpop.f32.mrb[0].mxu0
  %v232 = vadd.f32 0.0, %v231
  %v233 = vpop.f32.mrb[0].mxu0
  %v234 = vpop.f32.mrb[0].mxu0
  %v235 = vadd.f32 0.0, %v234
  %v236 = vpop.f32.mrb[0].mxu0
  %237 = vmatprep.mubr.bf16.mxu0 0
  %238 = vmatmul.mubr.bf16.gmra.mrb[0].mxu0 %v120
  %v239 = vpop.f32.mrb[0].mxu0
  %v240 = vadd.f32 0.0, %v239
  %v241 = vpop.f32.mrb[0].mxu0
  %v242 = vpop.f32.mrb[0].mxu0
  %v243 = vadd.f32 0.0, %v242
  %v244 = vpop.f32.mrb[0].mxu0
  %245 = vmatprep.mubr.bf16.mxu0 0
  %246 = vmatmul.mubr.bf16.gmra.mrb[0].mxu0 %v121
  %v247 = vpop.f32.mrb[0].mxu0
  %v248 = vadd.f32 0.0, %v247
  %v249 = vpop.f32.mrb[0].mxu0
  %v250 = vpop.f32.mrb[0].mxu0
  %v251 = vadd.f32 0.0, %v250
  %v252 = vpop.f32.mrb[0].mxu0
  %253 = vmatprep.mubr.bf16.mxu0 0
  %254 = vmatmul.mubr.bf16.gmra.mrb[0].mxu0 %v122
  %v255 = vpop.f32.mrb[0].mxu0
  %v256 = vadd.f32 0.0, %v255
  %v257 = vpop.f32.mrb[0].mxu0
  %v258 = vpop.f32.mrb[0].mxu0
  %v259 = vadd.f32 0.0, %v258
  %v260 = vpop.f32.mrb[0].mxu0
  %261 = vmatprep.mubr.bf16.mxu0 0
  %262 = vmatmul.mubr.bf16.gmra.mrb[0].mxu0 %v123
  %v263 = vpop.f32.mrb[0].mxu0
  %v264 = vadd.f32 0.0, %v263
  %v265 = vpop.f32.mrb[0].mxu0
  %v266 = vpop.f32.mrb[0].mxu0
  %v267 = vadd.f32 0.0, %v266
  %v268 = vpop.f32.mrb[0].mxu0
  %269 = vmatprep.mubr.bf16.mxu0 0
  %270 = vmatmul.mubr.bf16.gmra.mrb[0].mxu0 %v124
  %v271 = vpop.f32.mrb[0].mxu0
  %v272 = vadd.f32 0.0, %v271
  %v273 = vpop.f32.mrb[0].mxu0
  %v274 = vpop.f32.mrb[0].mxu0
  %v275 = vadd.f32 0.0, %v274
  %v276 = vpop.f32.mrb[0].mxu0
  %277 = vdwg.mxu0
  %v278 = vadd.f32 %v53, %v216
  %v279 = vadd.f32 %v54, %v219
  %v280 = vadd.f32 %v55, %v224
  %v281 = vadd.f32 %v56, %v227
  %v282 = vadd.f32 %v57, %v232
  %v283 = vadd.f32 %v58, %v235
  %v284 = vadd.f32 %v59, %v240
  %v285 = vadd.f32 %v60, %v243
  %v286 = vadd.f32 %v61, %v248
  %v287 = vadd.f32 %v62, %v251
  %v288 = vadd.f32 %v63, %v256
  %v289 = vadd.f32 %v64, %v259
  %v290 = vadd.f32 %v65, %v264
  %v291 = vadd.f32 %v66, %v267
  %v292 = vadd.f32 %v67, %v272
  %v293 = vadd.f32 %v68, %v275
  %294 = vst [vmem:[#allocation2] sm:$0xff] %v278
  %295 = vst [vmem:[#allocation2 + $0x8] sm:$0xff] %v279
  %296 = vst [vmem:[#allocation2 + $0x10] sm:$0xff] %v280
  %297 = vst [vmem:[#allocation2 + $0x18] sm:$0xff] %v281
  %298 = vst [vmem:[#allocation2 + $0x20] sm:$0xff] %v282
  %299 = vst [vmem:[#allocation2 + $0x28] sm:$0xff] %v283
  %300 = vst [vmem:[#allocation2 + $0x30] sm:$0xff] %v284
  %301 = vst [vmem:[#allocation2 + $0x38] sm:$0xff] %v285
  %302 = vst [vmem:[#allocation2 + $0x40] sm:$0xff] %v286
  %303 = vst [vmem:[#allocation2 + $0x48] sm:$0xff] %v287
  %304 = vst [vmem:[#allocation2 + $0x50] sm:$0xff] %v288
  %305 = vst [vmem:[#allocation2 + $0x58] sm:$0xff] %v289
  %306 = vst [vmem:[#allocation2 + $0x60] sm:$0xff] %v290
  %307 = vst [vmem:[#allocation2 + $0x68] sm:$0xff] %v291
  %308 = vst [vmem:[#allocation2 + $0x70] sm:$0xff] %v292
  %309 = vst [vmem:[#allocation2 + $0x78] sm:$0xff] %v293
  // Predicated region
  $region18: #{_lambda_.4} parent=0 // pred_check
    %p310 = pneg %p17
  $region19: #{_lambda_.4} parent=0 // pred_check_branch
    %312 = sbr.rel (%p310) target = $region21
  $region20: #{_lambda_.4} parent=0 // pred_region
    %v313 = vld [vmem:[#allocation2] sm:$0xff]
    %v314 = vld [vmem:[#allocation2 + $0x8] sm:$0xff]
    %v315 = vld [vmem:[#allocation2 + $0x10] sm:$0xff]
    %v316 = vld [vmem:[#allocation2 + $0x18] sm:$0xff]
    %v317 = vld [vmem:[#allocation2 + $0x20] sm:$0xff]
    %v318 = vld [vmem:[#allocation2 + $0x28] sm:$0xff]
    %v319 = vld [vmem:[#allocation2 + $0x30] sm:$0xff]
    %v320 = vld [vmem:[#allocation2 + $0x38] sm:$0xff]
    %v321 = vld [vmem:[#allocation2 + $0x40] sm:$0xff]
    %v322 = vld [vmem:[#allocation2 + $0x48] sm:$0xff]
    %v323 = vld [vmem:[#allocation2 + $0x50] sm:$0xff]
    %v324 = vld [vmem:[#allocation2 + $0x58] sm:$0xff]
    %v325 = vld [vmem:[#allocation2 + $0x60] sm:$0xff]
    %v326 = vld [vmem:[#allocation2 + $0x68] sm:$0xff]
    %v327 = vld [vmem:[#allocation2 + $0x70] sm:$0xff]
    %v328 = vld [vmem:[#allocation2 + $0x78] sm:$0xff]
    %v329 = vpack.c.bf16 %v314, %v313
    %v330 = vpack.c.bf16 %v316, %v315
    %v331 = vpack.c.bf16 %v318, %v317
    %v332 = vpack.c.bf16 %v320, %v319
    %v333 = vpack.c.bf16 %v322, %v321
    %v334 = vpack.c.bf16 %v324, %v323
    %v335 = vpack.c.bf16 %v326, %v325
    %v336 = vpack.c.bf16 %v328, %v327
    %v345 = vunpack.c.l.b16 %v329
    %v346 = vunpack.c.h.b16 %v329
    %v347 = vunpack.c.l.b16 %v330
    %v348 = vunpack.c.h.b16 %v330
    %v349 = vunpack.c.l.b16 %v331
    %v350 = vunpack.c.h.b16 %v331
    %v351 = vunpack.c.l.b16 %v332
    %v352 = vunpack.c.h.b16 %v332
    %v353 = vunpack.c.l.b16 %v333
    %v354 = vunpack.c.h.b16 %v333
    %v355 = vunpack.c.l.b16 %v334
    %v356 = vunpack.c.h.b16 %v334
    %v357 = vunpack.c.l.b16 %v335
    %v358 = vunpack.c.h.b16 %v335
    %v359 = vunpack.c.l.b16 %v336
    %v360 = vunpack.c.h.b16 %v336
    %v361 = vpack.c.b16 %v345, %v345
    %v362 = vpack.c.b16 %v346, %v346
    %v363 = vpack.c.b16 %v347, %v347
    %v364 = vpack.c.b16 %v348, %v348
    %v365 = vpack.c.b16 %v349, %v349
    %v366 = vpack.c.b16 %v350, %v350
    %v367 = vpack.c.b16 %v351, %v351
    %v368 = vpack.c.b16 %v352, %v352
    %v369 = vpack.c.b16 %v353, %v353
    %v370 = vpack.c.b16 %v354, %v354
    %v371 = vpack.c.b16 %v355, %v355
    %v372 = vpack.c.b16 %v356, %v356
    %v373 = vpack.c.b16 %v357, %v357
    %v374 = vpack.c.b16 %v358, %v358
    %v375 = vpack.c.b16 %v359, %v359
    %v376 = vpack.c.b16 %v360, %v360
    %393 = vst [vmem:[%s3] sm:$0xf] %v361
    %394 = vst [vmem:[%s3 + $0x4] sm:$0xf] %v362
    %395 = vst [vmem:[%s3 + $0x8] sm:$0xf] %v363
    %396 = vst [vmem:[%s3 + $0xc] sm:$0xf] %v364
    %397 = vst [vmem:[%s3 + $0x10] sm:$0xf] %v365
    %398 = vst [vmem:[%s3 + $0x14] sm:$0xf] %v366
    %399 = vst [vmem:[%s3 + $0x18] sm:$0xf] %v367
    %400 = vst [vmem:[%s3 + $0x1c] sm:$0xf] %v368
    %401 = vst [vmem:[%s3 + $0x20] sm:$0xf] %v369
    %402 = vst [vmem:[%s3 + $0x24] sm:$0xf] %v370
    %403 = vst [vmem:[%s3 + $0x28] sm:$0xf] %v371
    %404 = vst [vmem:[%s3 + $0x2c] sm:$0xf] %v372
    %405 = vst [vmem:[%s3 + $0x30] sm:$0xf] %v373
    %406 = vst [vmem:[%s3 + $0x34] sm:$0xf] %v374
    %407 = vst [vmem:[%s3 + $0x38] sm:$0xf] %v375
    %408 = vst [vmem:[%s3 + $0x3c] sm:$0xf] %v376
    %v409 = vld [vmem:[%s2] sm:$0xff]
    %v410 = vld [vmem:[%s2 + $0x8] sm:$0xff]
    %v411 = vld [vmem:[%s2 + $0x10] sm:$0xff]
    %v412 = vld [vmem:[%s2 + $0x18] sm:$0xff]
    %v413 = vld [vmem:[%s2 + $0x20] sm:$0xff]
    %v414 = vld [vmem:[%s2 + $0x28] sm:$0xff]
    %v415 = vld [vmem:[%s2 + $0x30] sm:$0xff]
    %v416 = vld [vmem:[%s2 + $0x38] sm:$0xff]
    %v417 = vld [vmem:[%s2 + $0x40] sm:$0xff]
    %v418 = vld [vmem:[%s2 + $0x48] sm:$0xff]
    %v419 = vld [vmem:[%s2 + $0x50] sm:$0xff]
    %v420 = vld [vmem:[%s2 + $0x58] sm:$0xff]
    %v421 = vld [vmem:[%s2 + $0x60] sm:$0xff]
    %v422 = vld [vmem:[%s2 + $0x68] sm:$0xff]
    %v423 = vld [vmem:[%s2 + $0x70] sm:$0xff]
    %v424 = vld [vmem:[%s2 + $0x78] sm:$0xff]
    %v425 = vld [vmem:[#allocation2] sm:$0xff]
    %v426 = vld [vmem:[#allocation2 + $0x8] sm:$0xff]
    %v427 = vld [vmem:[#allocation2 + $0x10] sm:$0xff]
    %v428 = vld [vmem:[#allocation2 + $0x18] sm:$0xff]
    %v429 = vld [vmem:[#allocation2 + $0x20] sm:$0xff]
    %v430 = vld [vmem:[#allocation2 + $0x28] sm:$0xff]
    %v431 = vld [vmem:[#allocation2 + $0x30] sm:$0xff]
    %v432 = vld [vmem:[#allocation2 + $0x38] sm:$0xff]
    %v433 = vld [vmem:[#allocation2 + $0x40] sm:$0xff]
    %v434 = vld [vmem:[#allocation2 + $0x48] sm:$0xff]
    %v435 = vld [vmem:[#allocation2 + $0x50] sm:$0xff]
    %v436 = vld [vmem:[#allocation2 + $0x58] sm:$0xff]
    %v437 = vld [vmem:[#allocation2 + $0x60] sm:$0xff]
    %v438 = vld [vmem:[#allocation2 + $0x68] sm:$0xff]
    %v439 = vld [vmem:[#allocation2 + $0x70] sm:$0xff]
    %v440 = vld [vmem:[#allocation2 + $0x78] sm:$0xff]
    %v441 = vadd.f32 %v409, %v425
    %v442 = vadd.f32 %v410, %v426
    %v443 = vadd.f32 %v411, %v427
    %v444 = vadd.f32 %v412, %v428
    %v445 = vadd.f32 %v413, %v429
    %v446 = vadd.f32 %v414, %v430
    %v447 = vadd.f32 %v415, %v431
    %v448 = vadd.f32 %v416, %v432
    %v449 = vadd.f32 %v417, %v433
    %v450 = vadd.f32 %v418, %v434
    %v451 = vadd.f32 %v419, %v435
    %v452 = vadd.f32 %v420, %v436
    %v453 = vadd.f32 %v421, %v437
    %v454 = vadd.f32 %v422, %v438
    %v455 = vadd.f32 %v423, %v439
    %v456 = vadd.f32 %v424, %v440
    %457 = vst [vmem:[%s4] sm:$0xff] %v441
    %458 = vst [vmem:[%s4 + $0x8] sm:$0xff] %v442
    %459 = vst [vmem:[%s4 + $0x10] sm:$0xff] %v443
    %460 = vst [vmem:[%s4 + $0x18] sm:$0xff] %v444
    %461 = vst [vmem:[%s4 + $0x20] sm:$0xff] %v445
    %462 = vst [vmem:[%s4 + $0x28] sm:$0xff] %v446
    %463 = vst [vmem:[%s4 + $0x30] sm:$0xff] %v447
    %464 = vst [vmem:[%s4 + $0x38] sm:$0xff] %v448
    %465 = vst [vmem:[%s4 + $0x40] sm:$0xff] %v449
    %466 = vst [vmem:[%s4 + $0x48] sm:$0xff] %v450
    %467 = vst [vmem:[%s4 + $0x50] sm:$0xff] %v451
    %468 = vst [vmem:[%s4 + $0x58] sm:$0xff] %v452
    %469 = vst [vmem:[%s4 + $0x60] sm:$0xff] %v453
    %470 = vst [vmem:[%s4 + $0x68] sm:$0xff] %v454
    %471 = vst [vmem:[%s4 + $0x70] sm:$0xff] %v455
    %472 = vst [vmem:[%s4 + $0x78] sm:$0xff] %v456
  $region21: #{_lambda_.4} parent=0 // pred_fallthru
    _
  // Predicated region
  $region22: #{_lambda_.4} parent=0 // pred_check
    _
  $region23: #{_lambda_.4} parent=0 // pred_check_branch
    %474 = sbr.rel (0) target = $region25
  $region24: #{_lambda_.4} parent=0 // pred_region
    _
  $region25: #{_lambda_.4} parent=0 // pred_fallthru
    _
  // Predicated region
  $region26: #{_lambda_.4} parent=0 // pred_check
    _
  $region27: #{_lambda_.4} parent=0 // pred_check_branch
    %476 = sbr.rel (0) target = $region29
  $region28: #{_lambda_.4} parent=0 // pred_region
    _
  $region29: #{_lambda_.4} parent=0 // pred_fallthru
    _
  // Predicated region
  $region30: #{_lambda_.4} parent=0 // pred_check
    _
  $region31: #{_lambda_.4} parent=0 // pred_check_branch
    %478 = sbr.rel (0) target = $region33
  $region32: #{_lambda_.4} parent=0 // pred_region
    _
  $region33: #{_lambda_.4} parent=0 // pred_fallthru
    _
  // Predicated region
  $region34: #{_lambda_.4} parent=0 // pred_check
    _
  $region35: #{_lambda_.4} parent=0 // pred_check_branch
    %480 = sbr.rel (0) target = $region37
  $region36: #{_lambda_.4} parent=0 // pred_region
    _
  $region37: #{_lambda_.4} parent=0 // pred_fallthru
    _

// kernel: _lambda_.5
$region0: #{_lambda_.5}
  #allocation0 [shape = 'u32[]', space=smem, size = 0x4, offset = 0x4, fixed_abs, tag = 'smem constant byte address 0x4 - core index']
  #allocation1 [shape = 'u32[144,128]{1,0:T(1,128)}', space=vmem, size = 0x12000, scoped, tag = 'internal scratch']
  #allocation2 [shape = 'f32[128,128]{1,0:T(8,128)}', space=vmem, size = 0x10000, scoped, tag = 'scratch operand']
  %s0 = inlined_call_operand.vmem [shape: bf16[128,128], index: 0, kind: input, shape index: {}]
  %s1 = inlined_call_operand.vmem [shape: bf16[128,128], index: 1, kind: input, shape index: {}]
  %s2 = inlined_call_operand.vmem [shape: f32[128,128], index: 2, kind: input, shape index: {}, may-alias: {2,3}]
  %s3 = inlined_call_operand.vmem [shape: f32[128,128], index: 3, kind: output, shape index: {}, may-alias: {2,3}]
  %s4 = sld [smem:[#allocation0]]
  $region30: #{_lambda_.5} parent=0
    _
  %s6 = ssub.s32 1, %s4
  %s7 = scalar_select 0, %s6, %s4
  // Predicated region
  $region2: #{_lambda_.5} parent=0 // pred_check
    _
  $region3: #{_lambda_.5} parent=0 // pred_check_branch
    %9 = sbr.rel (0) target = $region5
  $region4: #{_lambda_.5} parent=0 // pred_region
    _
  $region5: #{_lambda_.5} parent=0 // pred_fallthru
    _
  // Predicated region
  $region6: #{_lambda_.5} parent=0 // pred_check
    _
  $region7: #{_lambda_.5} parent=0 // pred_check_branch
    %11 = sbr.rel (0) target = $region9
  $region8: #{_lambda_.5} parent=0 // pred_region
    _
  $region9: #{_lambda_.5} parent=0 // pred_fallthru
    _
  // Predicated region
  $region10: #{_lambda_.5} parent=0 // pred_check
    _
  $region11: #{_lambda_.5} parent=0 // pred_check_branch
    %13 = sbr.rel (0) target = $region13
  $region12: #{_lambda_.5} parent=0 // pred_region
    _
  $region13: #{_lambda_.5} parent=0 // pred_fallthru
    _
  %p15 = scmp.eq.s32.totalorder 0, 0
  // Predicated region
  $region14: #{_lambda_.5} parent=0 // pred_check
    %p16 = pneg %p15
  $region15: #{_lambda_.5} parent=0 // pred_check_branch
    %18 = sbr.rel (%p16) target = $region17
  $region16: #{_lambda_.5} parent=0 // pred_region
    %19 = vst [vmem:[#allocation2] sm:$0xff] 0.0
    %20 = vst [vmem:[#allocation2 + $0x8] sm:$0xff] 0.0
    %21 = vst [vmem:[#allocation2 + $0x10] sm:$0xff] 0.0
    %22 = vst [vmem:[#allocation2 + $0x18] sm:$0xff] 0.0
    %23 = vst [vmem:[#allocation2 + $0x20] sm:$0xff] 0.0
    %24 = vst [vmem:[#allocation2 + $0x28] sm:$0xff] 0.0
    %25 = vst [vmem:[#allocation2 + $0x30] sm:$0xff] 0.0
    %26 = vst [vmem:[#allocation2 + $0x38] sm:$0xff] 0.0
    %27 = vst [vmem:[#allocation2 + $0x40] sm:$0xff] 0.0
    %28 = vst [vmem:[#allocation2 + $0x48] sm:$0xff] 0.0
    %29 = vst [vmem:[#allocation2 + $0x50] sm:$0xff] 0.0
    %30 = vst [vmem:[#allocation2 + $0x58] sm:$0xff] 0.0
    %31 = vst [vmem:[#allocation2 + $0x60] sm:$0xff] 0.0
    %32 = vst [vmem:[#allocation2 + $0x68] sm:$0xff] 0.0
    %33 = vst [vmem:[#allocation2 + $0x70] sm:$0xff] 0.0
    %34 = vst [vmem:[#allocation2 + $0x78] sm:$0xff] 0.0
  $region17: #{_lambda_.5} parent=0 // pred_fallthru
    _
  %v35 = vld [vmem:[%s1] sm:$0xf]
  %v36 = vld [vmem:[%s1 + $0x4] sm:$0xf]
  %v37 = vld [vmem:[%s1 + $0x8] sm:$0xf]
  %v38 = vld [vmem:[%s1 + $0xc] sm:$0xf]
  %v39 = vld [vmem:[%s1 + $0x10] sm:$0xf]
  %v40 = vld [vmem:[%s1 + $0x14] sm:$0xf]
  %v41 = vld [vmem:[%s1 + $0x18] sm:$0xf]
  %v42 = vld [vmem:[%s1 + $0x1c] sm:$0xf]
  %v43 = vld [vmem:[%s1 + $0x20] sm:$0xf]
  %v44 = vld [vmem:[%s1 + $0x24] sm:$0xf]
  %v45 = vld [vmem:[%s1 + $0x28] sm:$0xf]
  %v46 = vld [vmem:[%s1 + $0x2c] sm:$0xf]
  %v47 = vld [vmem:[%s1 + $0x30] sm:$0xf]
  %v48 = vld [vmem:[%s1 + $0x34] sm:$0xf]
  %v49 = vld [vmem:[%s1 + $0x38] sm:$0xf]
  %v50 = vld [vmem:[%s1 + $0x3c] sm:$0xf]
  %v51 = vld [vmem:[#allocation2] sm:$0xff]
  %v52 = vld [vmem:[#allocation2 + $0x8] sm:$0xff]
  %v53 = vld [vmem:[#allocation2 + $0x10] sm:$0xff]
  %v54 = vld [vmem:[#allocation2 + $0x18] sm:$0xff]
  %v55 = vld [vmem:[#allocation2 + $0x20] sm:$0xff]
  %v56 = vld [vmem:[#allocation2 + $0x28] sm:$0xff]
  %v57 = vld [vmem:[#allocation2 + $0x30] sm:$0xff]
  %v58 = vld [vmem:[#allocation2 + $0x38] sm:$0xff]
  %v59 = vld [vmem:[#allocation2 + $0x40] sm:$0xff]
  %v60 = vld [vmem:[#allocation2 + $0x48] sm:$0xff]
  %v61 = vld [vmem:[#allocation2 + $0x50] sm:$0xff]
  %v62 = vld [vmem:[#allocation2 + $0x58] sm:$0xff]
  %v63 = vld [vmem:[#allocation2 + $0x60] sm:$0xff]
  %v64 = vld [vmem:[#allocation2 + $0x68] sm:$0xff]
  %v65 = vld [vmem:[#allocation2 + $0x70] sm:$0xff]
  %v66 = vld [vmem:[#allocation2 + $0x78] sm:$0xff]
  %v67 = vld [vmem:[%s0] sm:$0xf]
  %v68 = vld [vmem:[%s0 + $0x4] sm:$0xf]
  %v69 = vld [vmem:[%s0 + $0x8] sm:$0xf]
  %v70 = vld [vmem:[%s0 + $0xc] sm:$0xf]
  %v71 = vld [vmem:[%s0 + $0x10] sm:$0xf]
  %v72 = vld [vmem:[%s0 + $0x14] sm:$0xf]
  %v73 = vld [vmem:[%s0 + $0x18] sm:$0xf]
  %v74 = vld [vmem:[%s0 + $0x1c] sm:$0xf]
  %v75 = vld [vmem:[%s0 + $0x20] sm:$0xf]
  %v76 = vld [vmem:[%s0 + $0x24] sm:$0xf]
  %v77 = vld [vmem:[%s0 + $0x28] sm:$0xf]
  %v78 = vld [vmem:[%s0 + $0x2c] sm:$0xf]
  %v79 = vld [vmem:[%s0 + $0x30] sm:$0xf]
  %v80 = vld [vmem:[%s0 + $0x34] sm:$0xf]
  %v81 = vld [vmem:[%s0 + $0x38] sm:$0xf]
  %v82 = vld [vmem:[%s0 + $0x3c] sm:$0xf]
  %v99 = vunpack.c.l.b16 %v67
  %v100 = vunpack.c.l.b16 %v68
  %v101 = vunpack.c.l.b16 %v69
  %v102 = vunpack.c.l.b16 %v70
  %v103 = vunpack.c.l.b16 %v71
  %v104 = vunpack.c.l.b16 %v72
  %v105 = vunpack.c.l.b16 %v73
  %v106 = vunpack.c.l.b16 %v74
  %v107 = vunpack.c.l.b16 %v75
  %v108 = vunpack.c.l.b16 %v76
  %v109 = vunpack.c.l.b16 %v77
  %v110 = vunpack.c.l.b16 %v78
  %v111 = vunpack.c.l.b16 %v79
  %v112 = vunpack.c.l.b16 %v80
  %v113 = vunpack.c.l.b16 %v81
  %v114 = vunpack.c.l.b16 %v82
  %v115 = vpack.c.b16 %v100, %v99
  %v116 = vpack.c.b16 %v102, %v101
  %v117 = vpack.c.b16 %v104, %v103
  %v118 = vpack.c.b16 %v106, %v105
  %v119 = vpack.c.b16 %v108, %v107
  %v120 = vpack.c.b16 %v110, %v109
  %v121 = vpack.c.b16 %v112, %v111
  %v122 = vpack.c.b16 %v114, %v113
  %v147 = vunpack.c.l.b16 %v35
  %v148 = vunpack.c.l.b16 %v36
  %v149 = vunpack.c.l.b16 %v37
  %v150 = vunpack.c.l.b16 %v38
  %v151 = vunpack.c.l.b16 %v39
  %v152 = vunpack.c.l.b16 %v40
  %v153 = vunpack.c.l.b16 %v41
  %v154 = vunpack.c.l.b16 %v42
  %v155 = vunpack.c.l.b16 %v43
  %v156 = vunpack.c.l.b16 %v44
  %v157 = vunpack.c.l.b16 %v45
  %v158 = vunpack.c.l.b16 %v46
  %v159 = vunpack.c.l.b16 %v47
  %v160 = vunpack.c.l.b16 %v48
  %v161 = vunpack.c.l.b16 %v49
  %v162 = vunpack.c.l.b16 %v50
  %v163 = vpack.c.b16 %v148, %v147
  %v164 = vpack.c.b16 %v150, %v149
  %v165 = vpack.c.b16 %v152, %v151
  %v166 = vpack.c.b16 %v154, %v153
  %v167 = vpack.c.b16 %v156, %v155
  %v168 = vpack.c.b16 %v158, %v157
  %v169 = vpack.c.b16 %v160, %v159
  %v170 = vpack.c.b16 %v162, %v161
  %179 = vmatprep.subr.bf16.mxu0 0
  %180 = vmatpush1.bf16.msra.mxu0 %v163
  %181 = vmatprep.subr.bf16.mxu0 0
  %182 = vmatpush1.bf16.msra.mxu0 %v164
  %183 = vmatprep.subr.bf16.mxu0 0
  %184 = vmatpush1.bf16.msra.mxu0 %v165
  %185 = vmatprep.subr.bf16.mxu0 0
  %186 = vmatpush1.bf16.msra.mxu0 %v166
  %187 = vmatprep.subr.bf16.mxu0 0
  %188 = vmatpush1.bf16.msra.mxu0 %v167
  %189 = vmatprep.subr.bf16.mxu0 0
  %190 = vmatpush1.bf16.msra.mxu0 %v168
  %191 = vmatprep.subr.bf16.mxu0 0
  %192 = vmatpush1.bf16.msra.mxu0 %v169
  %193 = vmatprep.subr.bf16.mxu0 0
  %194 = vmatpush1.bf16.msra.mxu0 %v170
  %195 = vmatprep.subr.bf16.mxu0 0
  %196 = vmatpush1.bf16.msra.mxu0 0
  %197 = vmatprep.subr.bf16.mxu0 0
  %198 = vmatpush1.bf16.msra.mxu0 0
  %199 = vmatprep.subr.bf16.mxu0 0
  %200 = vmatpush1.bf16.msra.mxu0 0
  %201 = vmatprep.subr.bf16.mxu0 0
  %202 = vmatpush1.bf16.msra.mxu0 0
  %203 = vmatprep.subr.bf16.mxu0 0
  %204 = vmatpush1.bf16.msra.mxu0 0
  %205 = vmatprep.subr.bf16.mxu0 0
  %206 = vmatpush1.bf16.msra.mxu0 0
  %207 = vmatprep.subr.bf16.mxu0 0
  %208 = vmatpush1.bf16.msra.mxu0 0
  %209 = vmatprep.subr.bf16.mxu0 0
  %210 = vmatpush1.bf16.msra.mxu0 0
  %211 = vmatprep.mubr.bf16.mxu0 0
  %212 = vmatmul.mubr.bf16.gmra.mrb[0].mxu0 %v115
  %v213 = vpop.f32.mrb[0].mxu0
  %v214 = vadd.f32 0.0, %v213
  %v215 = vpop.f32.mrb[0].mxu0
  %v216 = vpop.f32.mrb[0].mxu0
  %v217 = vadd.f32 0.0, %v216
  %v218 = vpop.f32.mrb[0].mxu0
  %219 = vmatprep.mubr.bf16.mxu0 0
  %220 = vmatmul.mubr.bf16.gmra.mrb[0].mxu0 %v116
  %v221 = vpop.f32.mrb[0].mxu0
  %v222 = vadd.f32 0.0, %v221
  %v223 = vpop.f32.mrb[0].mxu0
  %v224 = vpop.f32.mrb[0].mxu0
  %v225 = vadd.f32 0.0, %v224
  %v226 = vpop.f32.mrb[0].mxu0
  %227 = vmatprep.mubr.bf16.mxu0 0
  %228 = vmatmul.mubr.bf16.gmra.mrb[0].mxu0 %v117
  %v229 = vpop.f32.mrb[0].mxu0
  %v230 = vadd.f32 0.0, %v229
  %v231 = vpop.f32.mrb[0].mxu0
  %v232 = vpop.f32.mrb[0].mxu0
  %v233 = vadd.f32 0.0, %v232
  %v234 = vpop.f32.mrb[0].mxu0
  %235 = vmatprep.mubr.bf16.mxu0 0
  %236 = vmatmul.mubr.bf16.gmra.mrb[0].mxu0 %v118
  %v237 = vpop.f32.mrb[0].mxu0
  %v238 = vadd.f32 0.0, %v237
  %v239 = vpop.f32.mrb[0].mxu0
  %v240 = vpop.f32.mrb[0].mxu0
  %v241 = vadd.f32 0.0, %v240
  %v242 = vpop.f32.mrb[0].mxu0
  %243 = vmatprep.mubr.bf16.mxu0 0
  %244 = vmatmul.mubr.bf16.gmra.mrb[0].mxu0 %v119
  %v245 = vpop.f32.mrb[0].mxu0
  %v246 = vadd.f32 0.0, %v245
  %v247 = vpop.f32.mrb[0].mxu0
  %v248 = vpop.f32.mrb[0].mxu0
  %v249 = vadd.f32 0.0, %v248
  %v250 = vpop.f32.mrb[0].mxu0
  %251 = vmatprep.mubr.bf16.mxu0 0
  %252 = vmatmul.mubr.bf16.gmra.mrb[0].mxu0 %v120
  %v253 = vpop.f32.mrb[0].mxu0
  %v254 = vadd.f32 0.0, %v253
  %v255 = vpop.f32.mrb[0].mxu0
  %v256 = vpop.f32.mrb[0].mxu0
  %v257 = vadd.f32 0.0, %v256
  %v258 = vpop.f32.mrb[0].mxu0
  %259 = vmatprep.mubr.bf16.mxu0 0
  %260 = vmatmul.mubr.bf16.gmra.mrb[0].mxu0 %v121
  %v261 = vpop.f32.mrb[0].mxu0
  %v262 = vadd.f32 0.0, %v261
  %v263 = vpop.f32.mrb[0].mxu0
  %v264 = vpop.f32.mrb[0].mxu0
  %v265 = vadd.f32 0.0, %v264
  %v266 = vpop.f32.mrb[0].mxu0
  %267 = vmatprep.mubr.bf16.mxu0 0
  %268 = vmatmul.mubr.bf16.gmra.mrb[0].mxu0 %v122
  %v269 = vpop.f32.mrb[0].mxu0
  %v270 = vadd.f32 0.0, %v269
  %v271 = vpop.f32.mrb[0].mxu0
  %v272 = vpop.f32.mrb[0].mxu0
  %v273 = vadd.f32 0.0, %v272
  %v274 = vpop.f32.mrb[0].mxu0
  %275 = vdwg.mxu0
  %v276 = vadd.f32 %v51, %v214
  %v277 = vadd.f32 %v52, %v217
  %v278 = vadd.f32 %v53, %v222
  %v279 = vadd.f32 %v54, %v225
  %v280 = vadd.f32 %v55, %v230
  %v281 = vadd.f32 %v56, %v233
  %v282 = vadd.f32 %v57, %v238
  %v283 = vadd.f32 %v58, %v241
  %v284 = vadd.f32 %v59, %v246
  %v285 = vadd.f32 %v60, %v249
  %v286 = vadd.f32 %v61, %v254
  %v287 = vadd.f32 %v62, %v257
  %v288 = vadd.f32 %v63, %v262
  %v289 = vadd.f32 %v64, %v265
  %v290 = vadd.f32 %v65, %v270
  %v291 = vadd.f32 %v66, %v273
  %292 = vst [vmem:[#allocation2] sm:$0xff] %v276
  %293 = vst [vmem:[#allocation2 + $0x8] sm:$0xff] %v277
  %294 = vst [vmem:[#allocation2 + $0x10] sm:$0xff] %v278
  %295 = vst [vmem:[#allocation2 + $0x18] sm:$0xff] %v279
  %296 = vst [vmem:[#allocation2 + $0x20] sm:$0xff] %v280
  %297 = vst [vmem:[#allocation2 + $0x28] sm:$0xff] %v281
  %298 = vst [vmem:[#allocation2 + $0x30] sm:$0xff] %v282
  %299 = vst [vmem:[#allocation2 + $0x38] sm:$0xff] %v283
  %300 = vst [vmem:[#allocation2 + $0x40] sm:$0xff] %v284
  %301 = vst [vmem:[#allocation2 + $0x48] sm:$0xff] %v285
  %302 = vst [vmem:[#allocation2 + $0x50] sm:$0xff] %v286
  %303 = vst [vmem:[#allocation2 + $0x58] sm:$0xff] %v287
  %304 = vst [vmem:[#allocation2 + $0x60] sm:$0xff] %v288
  %305 = vst [vmem:[#allocation2 + $0x68] sm:$0xff] %v289
  %306 = vst [vmem:[#allocation2 + $0x70] sm:$0xff] %v290
  %307 = vst [vmem:[#allocation2 + $0x78] sm:$0xff] %v291
  // Predicated region
  $region18: #{_lambda_.5} parent=0 // pred_check
    %p308 = pneg %p15
  $region19: #{_lambda_.5} parent=0 // pred_check_branch
    %310 = sbr.rel (%p308) target = $region21
  $region20: #{_lambda_.5} parent=0 // pred_region
    %v311 = vld [vmem:[%s2] sm:$0xff]
    %v312 = vld [vmem:[%s2 + $0x8] sm:$0xff]
    %v313 = vld [vmem:[%s2 + $0x10] sm:$0xff]
    %v314 = vld [vmem:[%s2 + $0x18] sm:$0xff]
    %v315 = vld [vmem:[%s2 + $0x20] sm:$0xff]
    %v316 = vld [vmem:[%s2 + $0x28] sm:$0xff]
    %v317 = vld [vmem:[%s2 + $0x30] sm:$0xff]
    %v318 = vld [vmem:[%s2 + $0x38] sm:$0xff]
    %v319 = vld [vmem:[%s2 + $0x40] sm:$0xff]
    %v320 = vld [vmem:[%s2 + $0x48] sm:$0xff]
    %v321 = vld [vmem:[%s2 + $0x50] sm:$0xff]
    %v322 = vld [vmem:[%s2 + $0x58] sm:$0xff]
    %v323 = vld [vmem:[%s2 + $0x60] sm:$0xff]
    %v324 = vld [vmem:[%s2 + $0x68] sm:$0xff]
    %v325 = vld [vmem:[%s2 + $0x70] sm:$0xff]
    %v326 = vld [vmem:[%s2 + $0x78] sm:$0xff]
    %v327 = vld [vmem:[#allocation2] sm:$0xff]
    %v328 = vld [vmem:[#allocation2 + $0x8] sm:$0xff]
    %v329 = vld [vmem:[#allocation2 + $0x10] sm:$0xff]
    %v330 = vld [vmem:[#allocation2 + $0x18] sm:$0xff]
    %v331 = vld [vmem:[#allocation2 + $0x20] sm:$0xff]
    %v332 = vld [vmem:[#allocation2 + $0x28] sm:$0xff]
    %v333 = vld [vmem:[#allocation2 + $0x30] sm:$0xff]
    %v334 = vld [vmem:[#allocation2 + $0x38] sm:$0xff]
    %v335 = vld [vmem:[#allocation2 + $0x40] sm:$0xff]
    %v336 = vld [vmem:[#allocation2 + $0x48] sm:$0xff]
    %v337 = vld [vmem:[#allocation2 + $0x50] sm:$0xff]
    %v338 = vld [vmem:[#allocation2 + $0x58] sm:$0xff]
    %v339 = vld [vmem:[#allocation2 + $0x60] sm:$0xff]
    %v340 = vld [vmem:[#allocation2 + $0x68] sm:$0xff]
    %v341 = vld [vmem:[#allocation2 + $0x70] sm:$0xff]
    %v342 = vld [vmem:[#allocation2 + $0x78] sm:$0xff]
    %v343 = vadd.f32 %v311, %v327
    %v344 = vadd.f32 %v312, %v328
    %v345 = vadd.f32 %v313, %v329
    %v346 = vadd.f32 %v314, %v330
    %v347 = vadd.f32 %v315, %v331
    %v348 = vadd.f32 %v316, %v332
    %v349 = vadd.f32 %v317, %v333
    %v350 = vadd.f32 %v318, %v334
    %v351 = vadd.f32 %v319, %v335
    %v352 = vadd.f32 %v320, %v336
    %v353 = vadd.f32 %v321, %v337
    %v354 = vadd.f32 %v322, %v338
    %v355 = vadd.f32 %v323, %v339
    %v356 = vadd.f32 %v324, %v340
    %v357 = vadd.f32 %v325, %v341
    %v358 = vadd.f32 %v326, %v342
    %v359 = vmul.f32 %v343, 0.33333334
    %v360 = vmul.f32 %v344, 0.33333334
    %v361 = vmul.f32 %v345, 0.33333334
    %v362 = vmul.f32 %v346, 0.33333334
    %v363 = vmul.f32 %v347, 0.33333334
    %v364 = vmul.f32 %v348, 0.33333334
    %v365 = vmul.f32 %v349, 0.33333334
    %v366 = vmul.f32 %v350, 0.33333334
    %v367 = vmul.f32 %v351, 0.33333334
    %v368 = vmul.f32 %v352, 0.33333334
    %v369 = vmul.f32 %v353, 0.33333334
    %v370 = vmul.f32 %v354, 0.33333334
    %v371 = vmul.f32 %v355, 0.33333334
    %v372 = vmul.f32 %v356, 0.33333334
    %v373 = vmul.f32 %v357, 0.33333334
    %v374 = vmul.f32 %v358, 0.33333334
    %375 = vst [vmem:[%s3] sm:$0xff] %v359
    %376 = vst [vmem:[%s3 + $0x8] sm:$0xff] %v360
    %377 = vst [vmem:[%s3 + $0x10] sm:$0xff] %v361
    %378 = vst [vmem:[%s3 + $0x18] sm:$0xff] %v362
    %379 = vst [vmem:[%s3 + $0x20] sm:$0xff] %v363
    %380 = vst [vmem:[%s3 + $0x28] sm:$0xff] %v364
    %381 = vst [vmem:[%s3 + $0x30] sm:$0xff] %v365
    %382 = vst [vmem:[%s3 + $0x38] sm:$0xff] %v366
    %383 = vst [vmem:[%s3 + $0x40] sm:$0xff] %v367
    %384 = vst [vmem:[%s3 + $0x48] sm:$0xff] %v368
    %385 = vst [vmem:[%s3 + $0x50] sm:$0xff] %v369
    %386 = vst [vmem:[%s3 + $0x58] sm:$0xff] %v370
    %387 = vst [vmem:[%s3 + $0x60] sm:$0xff] %v371
    %388 = vst [vmem:[%s3 + $0x68] sm:$0xff] %v372
    %389 = vst [vmem:[%s3 + $0x70] sm:$0xff] %v373
    %390 = vst [vmem:[%s3 + $0x78] sm:$0xff] %v374
  $region21: #{_lambda_.5} parent=0 // pred_fallthru
    _
  // Predicated region
  $region22: #{_lambda_.5} parent=0 // pred_check
    _
  $region23: #{_lambda_.5} parent=0 // pred_check_branch
    %392 = sbr.rel (0) target = $region25
  $region24: #{_lambda_.5} parent=0 // pred_region
    _
  $region25: #{_lambda_.5} parent=0 // pred_fallthru
    _
  // Predicated region
  $region26: #{_lambda_.5} parent=0 // pred_check
    _
  $region27: #{_lambda_.5} parent=0 // pred_check_branch
    %394 = sbr.rel (0) target = $region29
  $region28: #{_lambda_.5} parent=0 // pred_region
    _
  $region29: #{_lambda_.5} parent=0 // pred_fallthru
    _

// kernel: _lambda_.6
$region0: #{_lambda_.6}
  #allocation0 [shape = 'u32[]', space=smem, size = 0x4, offset = 0x4, fixed_abs, tag = 'smem constant byte address 0x4 - core index']
  #allocation1 [shape = 'u32[144,128]{1,0:T(1,128)}', space=vmem, size = 0x12000, scoped, tag = 'internal scratch']
  #allocation2 [shape = 'f32[64,128]{1,0:T(8,128)}', space=vmem, size = 0x8000, scoped, tag = 'scratch operand']
  %s0 = inlined_call_operand.vmem [shape: bf16[64,64], index: 0, kind: input, shape index: {}]
  %s1 = inlined_call_operand.vmem [shape: bf16[64,128], index: 1, kind: input, shape index: {}]
  %s2 = inlined_call_operand.vmem [shape: f32[64,128], index: 2, kind: input, shape index: {}, may-alias: {2,3}]
  %s3 = inlined_call_operand.vmem [shape: f32[64,128], index: 3, kind: output, shape index: {}, may-alias: {2,3}]
  %s4 = sld [smem:[#allocation0]]
  $region30: #{_lambda_.6} parent=0
    _
  %s6 = ssub.s32 1, %s4
  %s7 = scalar_select 0, %s6, %s4
  // Predicated region
  $region2: #{_lambda_.6} parent=0 // pred_check
    _
  $region3: #{_lambda_.6} parent=0 // pred_check_branch
    %9 = sbr.rel (0) target = $region5
  $region4: #{_lambda_.6} parent=0 // pred_region
    _
  $region5: #{_lambda_.6} parent=0 // pred_fallthru
    _
  // Predicated region
  $region6: #{_lambda_.6} parent=0 // pred_check
    _
  $region7: #{_lambda_.6} parent=0 // pred_check_branch
    %11 = sbr.rel (0) target = $region9
  $region8: #{_lambda_.6} parent=0 // pred_region
    _
  $region9: #{_lambda_.6} parent=0 // pred_fallthru
    _
  // Predicated region
  $region10: #{_lambda_.6} parent=0 // pred_check
    _
  $region11: #{_lambda_.6} parent=0 // pred_check_branch
    %13 = sbr.rel (0) target = $region13
  $region12: #{_lambda_.6} parent=0 // pred_region
    _
  $region13: #{_lambda_.6} parent=0 // pred_fallthru
    _
  %p15 = scmp.eq.s32.totalorder 0, 0
  // Predicated region
  $region14: #{_lambda_.6} parent=0 // pred_check
    %p16 = pneg %p15
  $region15: #{_lambda_.6} parent=0 // pred_check_branch
    %18 = sbr.rel (%p16) target = $region17
  $region16: #{_lambda_.6} parent=0 // pred_region
    %19 = vst [vmem:[#allocation2] sm:$0xff] 0.0
    %20 = vst [vmem:[#allocation2 + $0x8] sm:$0xff] 0.0
    %21 = vst [vmem:[#allocation2 + $0x10] sm:$0xff] 0.0
    %22 = vst [vmem:[#allocation2 + $0x18] sm:$0xff] 0.0
    %23 = vst [vmem:[#allocation2 + $0x20] sm:$0xff] 0.0
    %24 = vst [vmem:[#allocation2 + $0x28] sm:$0xff] 0.0
    %25 = vst [vmem:[#allocation2 + $0x30] sm:$0xff] 0.0
    %26 = vst [vmem:[#allocation2 + $0x38] sm:$0xff] 0.0
  $region17: #{_lambda_.6} parent=0 // pred_fallthru
    _
  %v27 = vld [vmem:[%s1] sm:$0xf]
  %v28 = vld [vmem:[%s1 + $0x4] sm:$0xf]
  %v29 = vld [vmem:[%s1 + $0x8] sm:$0xf]
  %v30 = vld [vmem:[%s1 + $0xc] sm:$0xf]
  %v31 = vld [vmem:[%s1 + $0x10] sm:$0xf]
  %v32 = vld [vmem:[%s1 + $0x14] sm:$0xf]
  %v33 = vld [vmem:[%s1 + $0x18] sm:$0xf]
  %v34 = vld [vmem:[%s1 + $0x1c] sm:$0xf]
  %v35 = vld [vmem:[#allocation2] sm:$0xff]
  %v36 = vld [vmem:[#allocation2 + $0x8] sm:$0xff]
  %v37 = vld [vmem:[#allocation2 + $0x10] sm:$0xff]
  %v38 = vld [vmem:[#allocation2 + $0x18] sm:$0xff]
  %v39 = vld [vmem:[#allocation2 + $0x20] sm:$0xff]
  %v40 = vld [vmem:[#allocation2 + $0x28] sm:$0xff]
  %v41 = vld [vmem:[#allocation2 + $0x30] sm:$0xff]
  %v42 = vld [vmem:[#allocation2 + $0x38] sm:$0xff]
  %v43 = vld [vmem:[%s0] sm:$0xf]
  %v44 = vld [vmem:[%s0 + $0x4] sm:$0xf]
  %v45 = vld [vmem:[%s0 + $0x8] sm:$0xf]
  %v46 = vld [vmem:[%s0 + $0xc] sm:$0xf]
  %v47 = vld [vmem:[%s0 + $0x10] sm:$0xf]
  %v48 = vld [vmem:[%s0 + $0x14] sm:$0xf]
  %v49 = vld [vmem:[%s0 + $0x18] sm:$0xf]
  %v50 = vld [vmem:[%s0 + $0x1c] sm:$0xf]
  %v59 = vunpack.c.l.b16 %v43
  %v60 = vunpack.c.l.b16 %v44
  %v61 = vunpack.c.l.b16 %v45
  %v62 = vunpack.c.l.b16 %v46
  %v63 = vunpack.c.l.b16 %v47
  %v64 = vunpack.c.l.b16 %v48
  %v65 = vunpack.c.l.b16 %v49
  %v66 = vunpack.c.l.b16 %v50
  %v67 = vpack.c.b16 %v60, %v59
  %v68 = vpack.c.b16 %v62, %v61
  %v69 = vpack.c.b16 %v64, %v63
  %v70 = vpack.c.b16 %v66, %v65
  %v79 = vunpack.c.l.b16 %v27
  %v80 = vunpack.c.l.b16 %v28
  %v81 = vunpack.c.l.b16 %v29
  %v82 = vunpack.c.l.b16 %v30
  %v83 = vunpack.c.l.b16 %v31
  %v84 = vunpack.c.l.b16 %v32
  %v85 = vunpack.c.l.b16 %v33
  %v86 = vunpack.c.l.b16 %v34
  %v87 = vpack.c.b16 %v80, %v79
  %v88 = vpack.c.b16 %v82, %v81
  %v89 = vpack.c.b16 %v84, %v83
  %v90 = vpack.c.b16 %v86, %v85
  %vm95 = vcmask 523264
  %v97 = vsel %vm95, %v67, 0
  %v100 = vsel %vm95, %v68, 0
  %v103 = vsel %vm95, %v69, 0
  %v106 = vsel %vm95, %v70, 0
  %108 = vmatprep.subr.bf16.mxu0 0
  %109 = vmatpush1.bf16.msra.mxu0 %v87
  %110 = vmatprep.subr.bf16.mxu0 0
  %111 = vmatpush1.bf16.msra.mxu0 %v88
  %112 = vmatprep.subr.bf16.mxu0 0
  %113 = vmatpush1.bf16.msra.mxu0 %v89
  %114 = vmatprep.subr.bf16.mxu0 0
  %115 = vmatpush1.bf16.msra.mxu0 %v90
  %116 = vmatprep.subr.bf16.mxu0 0
  %117 = vmatpush1.bf16.msra.mxu0 0
  %118 = vmatprep.subr.bf16.mxu0 0
  %119 = vmatpush1.bf16.msra.mxu0 0
  %120 = vmatprep.subr.bf16.mxu0 0
  %121 = vmatpush1.bf16.msra.mxu0 0
  %122 = vmatprep.subr.bf16.mxu0 0
  %123 = vmatpush1.bf16.msra.mxu0 0
  %124 = vmatprep.subr.bf16.mxu0 0
  %125 = vmatpush1.bf16.msra.mxu0 0
  %126 = vmatprep.subr.bf16.mxu0 0
  %127 = vmatpush1.bf16.msra.mxu0 0
  %128 = vmatprep.subr.bf16.mxu0 0
  %129 = vmatpush1.bf16.msra.mxu0 0
  %130 = vmatprep.subr.bf16.mxu0 0
  %131 = vmatpush1.bf16.msra.mxu0 0
  %132 = vmatprep.subr.bf16.mxu0 0
  %133 = vmatpush1.bf16.msra.mxu0 0
  %134 = vmatprep.subr.bf16.mxu0 0
  %135 = vmatpush1.bf16.msra.mxu0 0
  %136 = vmatprep.subr.bf16.mxu0 0
  %137 = vmatpush1.bf16.msra.mxu0 0
  %138 = vmatprep.subr.bf16.mxu0 0
  %139 = vmatpush1.bf16.msra.mxu0 0
  %140 = vmatprep.mubr.bf16.mxu0 0
  %141 = vmatmul.mubr.bf16.gmra.mrb[0].mxu0 %v97
  %v142 = vpop.f32.mrb[0].mxu0
  %v143 = vadd.f32 0.0, %v142
  %v144 = vpop.f32.mrb[0].mxu0
  %v145 = vpop.f32.mrb[0].mxu0
  %v146 = vadd.f32 0.0, %v145
  %v147 = vpop.f32.mrb[0].mxu0
  %148 = vmatprep.mubr.bf16.mxu0 0
  %149 = vmatmul.mubr.bf16.gmra.mrb[0].mxu0 %v100
  %v150 = vpop.f32.mrb[0].mxu0
  %v151 = vadd.f32 0.0, %v150
  %v152 = vpop.f32.mrb[0].mxu0
  %v153 = vpop.f32.mrb[0].mxu0
  %v154 = vadd.f32 0.0, %v153
  %v155 = vpop.f32.mrb[0].mxu0
  %156 = vmatprep.mubr.bf16.mxu0 0
  %157 = vmatmul.mubr.bf16.gmra.mrb[0].mxu0 %v103
  %v158 = vpop.f32.mrb[0].mxu0
  %v159 = vadd.f32 0.0, %v158
  %v160 = vpop.f32.mrb[0].mxu0
  %v161 = vpop.f32.mrb[0].mxu0
  %v162 = vadd.f32 0.0, %v161
  %v163 = vpop.f32.mrb[0].mxu0
  %164 = vmatprep.mubr.bf16.mxu0 0
  %165 = vmatmul.mubr.bf16.gmra.mrb[0].mxu0 %v106
  %v166 = vpop.f32.mrb[0].mxu0
  %v167 = vadd.f32 0.0, %v166
  %v168 = vpop.f32.mrb[0].mxu0
  %v169 = vpop.f32.mrb[0].mxu0
  %v170 = vadd.f32 0.0, %v169
  %v171 = vpop.f32.mrb[0].mxu0
  %172 = vdwg.mxu0
  %v173 = vadd.f32 %v35, %v143
  %v174 = vadd.f32 %v36, %v146
  %v175 = vadd.f32 %v37, %v151
  %v176 = vadd.f32 %v38, %v154
  %v177 = vadd.f32 %v39, %v159
  %v178 = vadd.f32 %v40, %v162
  %v179 = vadd.f32 %v41, %v167
  %v180 = vadd.f32 %v42, %v170
  %181 = vst [vmem:[#allocation2] sm:$0xff] %v173
  %182 = vst [vmem:[#allocation2 + $0x8] sm:$0xff] %v174
  %183 = vst [vmem:[#allocation2 + $0x10] sm:$0xff] %v175
  %184 = vst [vmem:[#allocation2 + $0x18] sm:$0xff] %v176
  %185 = vst [vmem:[#allocation2 + $0x20] sm:$0xff] %v177
  %186 = vst [vmem:[#allocation2 + $0x28] sm:$0xff] %v178
  %187 = vst [vmem:[#allocation2 + $0x30] sm:$0xff] %v179
  %188 = vst [vmem:[#allocation2 + $0x38] sm:$0xff] %v180
  // Predicated region
  $region18: #{_lambda_.6} parent=0 // pred_check
    %p189 = pneg %p15
  $region19: #{_lambda_.6} parent=0 // pred_check_branch
    %191 = sbr.rel (%p189) target = $region21
  $region20: #{_lambda_.6} parent=0 // pred_region
    %v192 = vld [vmem:[%s2] sm:$0xff]
    %v193 = vld [vmem:[%s2 + $0x8] sm:$0xff]
    %v194 = vld [vmem:[%s2 + $0x10] sm:$0xff]
    %v195 = vld [vmem:[%s2 + $0x18] sm:$0xff]
    %v196 = vld [vmem:[%s2 + $0x20] sm:$0xff]
    %v197 = vld [vmem:[%s2 + $0x28] sm:$0xff]
    %v198 = vld [vmem:[%s2 + $0x30] sm:$0xff]
    %v199 = vld [vmem:[%s2 + $0x38] sm:$0xff]
    %v200 = vld [vmem:[#allocation2] sm:$0xff]
    %v201 = vld [vmem:[#allocation2 + $0x8] sm:$0xff]
    %v202 = vld [vmem:[#allocation2 + $0x10] sm:$0xff]
    %v203 = vld [vmem:[#allocation2 + $0x18] sm:$0xff]
    %v204 = vld [vmem:[#allocation2 + $0x20] sm:$0xff]
    %v205 = vld [vmem:[#allocation2 + $0x28] sm:$0xff]
    %v206 = vld [vmem:[#allocation2 + $0x30] sm:$0xff]
    %v207 = vld [vmem:[#allocation2 + $0x38] sm:$0xff]
    %v208 = vadd.f32 %v192, %v200
    %v209 = vadd.f32 %v193, %v201
    %v210 = vadd.f32 %v194, %v202
    %v211 = vadd.f32 %v195, %v203
    %v212 = vadd.f32 %v196, %v204
    %v213 = vadd.f32 %v197, %v205
    %v214 = vadd.f32 %v198, %v206
    %v215 = vadd.f32 %v199, %v207
    %v216 = vmul.f32 %v208, 0.5
    %v217 = vmul.f32 %v209, 0.5
    %v218 = vmul.f32 %v210, 0.5
    %v219 = vmul.f32 %v211, 0.5
    %v220 = vmul.f32 %v212, 0.5
    %v221 = vmul.f32 %v213, 0.5
    %v222 = vmul.f32 %v214, 0.5
    %v223 = vmul.f32 %v215, 0.5
    %224 = vst [vmem:[%s3] sm:$0xff] %v216
    %225 = vst [vmem:[%s3 + $0x8] sm:$0xff] %v217
    %226 = vst [vmem:[%s3 + $0x10] sm:$0xff] %v218
    %227 = vst [vmem:[%s3 + $0x18] sm:$0xff] %v219
    %228 = vst [vmem:[%s3 + $0x20] sm:$0xff] %v220
    %229 = vst [vmem:[%s3 + $0x28] sm:$0xff] %v221
    %230 = vst [vmem:[%s3 + $0x30] sm:$0xff] %v222
    %231 = vst [vmem:[%s3 + $0x38] sm:$0xff] %v223
  $region21: #{_lambda_.6} parent=0 // pred_fallthru
    _
  // Predicated region
  $region22: #{_lambda_.6} parent=0 // pred_check
    _
  $region23: #{_lambda_.6} parent=0 // pred_check_branch
    %233 = sbr.rel (0) target = $region25
  $region24: #{_lambda_.6} parent=0 // pred_region
    _
  $region25: #{_lambda_.6} parent=0 // pred_fallthru
    _
  // Predicated region
  $region26: #{_lambda_.6} parent=0 // pred_check
    _
  $region27: #{_lambda_.6} parent=0 // pred_check_branch
    %235 = sbr.rel (0) target = $region29
  $region28: #{_lambda_.6} parent=0 // pred_region
    _
  $region29: #{_lambda_.6} parent=0 // pred_fallthru
    _

// kernel: _lambda_.7
$region0: #{_lambda_.7}
  #allocation0 [shape = 'u32[]', space=smem, size = 0x4, offset = 0x4, fixed_abs, tag = 'smem constant byte address 0x4 - core index']
  #allocation1 [shape = 'u32[144,128]{1,0:T(1,128)}', space=vmem, size = 0x12000, scoped, tag = 'internal scratch']
  %s0 = inlined_call_operand.vmem [shape: f32[64,128], index: 0, kind: input, shape index: {}]
  %s1 = inlined_call_operand.vmem [shape: f32[64,128], index: 1, kind: input, shape index: {}]
  %s2 = inlined_call_operand.vmem [shape: f32[64,128], index: 2, kind: input, shape index: {}]
  %s3 = inlined_call_operand.vmem [shape: f32[384,128], index: 3, kind: input, shape index: {}]
  %s4 = inlined_call_operand.vmem [shape: f32[1,128], index: 4, kind: input, shape index: {}]
  %s5 = inlined_call_operand.hbm [shape: f32[64,128], index: 5, kind: output, shape index: {}]
  %s6 = sld [smem:[#allocation0]]
  $region30: #{_lambda_.7} parent=0
    _
  %s8 = ssub.s32 1, %s6
  %s9 = scalar_select 0, %s8, %s6
  $region1: #{_lambda_.7} parent=0
    #allocation2 [shape = 'u8[32768]{0}', space=vmem, size = 0x8000, scoped, tag = 'output window, operand 0, single buffered']
    #allocation3 [shape = 's32[1]{0}', space=sflag, size = 0x4, scoped, tag = 'scoped memory for _lambda_.7']
    %10 = vsyncpa [#allocation3], 0
    // Predicated region
    $region2: #{_lambda_.7} parent=1 // pred_check
      _
    $region3: #{_lambda_.7} parent=1 // pred_check_branch
      %12 = sbr.rel (0) target = $region5
    $region4: #{_lambda_.7} parent=1 // pred_region
      _
    $region5: #{_lambda_.7} parent=1 // pred_fallthru
      _
    // Predicated region
    $region6: #{_lambda_.7} parent=1 // pred_check
      _
    $region7: #{_lambda_.7} parent=1 // pred_check_branch
      %14 = sbr.rel (0) target = $region9
    $region8: #{_lambda_.7} parent=1 // pred_region
      _
    $region9: #{_lambda_.7} parent=1 // pred_fallthru
      _
    // Predicated region
    $region10: #{_lambda_.7} parent=1 // pred_check
      _
    $region11: #{_lambda_.7} parent=1 // pred_check_branch
      %16 = sbr.rel (0) target = $region13
    $region12: #{_lambda_.7} parent=1 // pred_region
      _
    $region13: #{_lambda_.7} parent=1 // pred_fallthru
      _
    // Predicated region
    $region14: #{_lambda_.7} parent=1 // pred_check
      _
    $region15: #{_lambda_.7} parent=1 // pred_check_branch
      %18 = sbr.rel (0) target = $region17
    $region16: #{_lambda_.7} parent=1 // pred_region
      _
    $region17: #{_lambda_.7} parent=1 // pred_fallthru
      _
    // Predicated region
    $region18: #{_lambda_.7} parent=1 // pred_check
      _
    $region19: #{_lambda_.7} parent=1 // pred_check_branch
      %20 = sbr.rel (0) target = $region21
    $region20: #{_lambda_.7} parent=1 // pred_region
      _
    $region21: #{_lambda_.7} parent=1 // pred_fallthru
      _
    %v22 = vld [vmem:[%s3] sm:$0xff]
    %v23 = vld [vmem:[%s3 + $0x8] sm:$0xff]
    %v24 = vld [vmem:[%s3 + $0x10] sm:$0xff]
    %v25 = vld [vmem:[%s3 + $0x18] sm:$0xff]
    %v26 = vld [vmem:[%s3 + $0x20] sm:$0xff]
    %v27 = vld [vmem:[%s3 + $0x28] sm:$0xff]
    %v28 = vld [vmem:[%s3 + $0x30] sm:$0xff]
    %v29 = vld [vmem:[%s3 + $0x38] sm:$0xff]
    %v30 = vld [vmem:[%s3 + $0x40] sm:$0xff]
    %v31 = vld [vmem:[%s3 + $0x48] sm:$0xff]
    %v32 = vld [vmem:[%s3 + $0x50] sm:$0xff]
    %v33 = vld [vmem:[%s3 + $0x58] sm:$0xff]
    %v34 = vld [vmem:[%s3 + $0x60] sm:$0xff]
    %v35 = vld [vmem:[%s3 + $0x68] sm:$0xff]
    %v36 = vld [vmem:[%s3 + $0x70] sm:$0xff]
    %v37 = vld [vmem:[%s3 + $0x78] sm:$0xff]
    %v38 = vld [vmem:[%s3 + $0x80] sm:$0xff]
    %v39 = vld [vmem:[%s3 + $0x88] sm:$0xff]
    %v40 = vld [vmem:[%s3 + $0x90] sm:$0xff]
    %v41 = vld [vmem:[%s3 + $0x98] sm:$0xff]
    %v42 = vld [vmem:[%s3 + $0xa0] sm:$0xff]
    %v43 = vld [vmem:[%s3 + $0xa8] sm:$0xff]
    %v44 = vld [vmem:[%s3 + $0xb0] sm:$0xff]
    %v45 = vld [vmem:[%s3 + $0xb8] sm:$0xff]
    %v46 = vld [vmem:[%s3 + $0xc0] sm:$0xff]
    %v47 = vld [vmem:[%s3 + $0xc8] sm:$0xff]
    %v48 = vld [vmem:[%s3 + $0xd0] sm:$0xff]
    %v49 = vld [vmem:[%s3 + $0xd8] sm:$0xff]
    %v50 = vld [vmem:[%s3 + $0xe0] sm:$0xff]
    %v51 = vld [vmem:[%s3 + $0xe8] sm:$0xff]
    %v52 = vld [vmem:[%s3 + $0xf0] sm:$0xff]
    %v53 = vld [vmem:[%s3 + $0xf8] sm:$0xff]
    %v54 = vld [vmem:[%s3 + $0x100] sm:$0xff]
    %v55 = vld [vmem:[%s3 + $0x108] sm:$0xff]
    %v56 = vld [vmem:[%s3 + $0x110] sm:$0xff]
    %v57 = vld [vmem:[%s3 + $0x118] sm:$0xff]
    %v58 = vld [vmem:[%s3 + $0x120] sm:$0xff]
    %v59 = vld [vmem:[%s3 + $0x128] sm:$0xff]
    %v60 = vld [vmem:[%s3 + $0x130] sm:$0xff]
    %v61 = vld [vmem:[%s3 + $0x138] sm:$0xff]
    %v62 = vld [vmem:[%s3 + $0x140] sm:$0xff]
    %v63 = vld [vmem:[%s3 + $0x148] sm:$0xff]
    %v64 = vld [vmem:[%s3 + $0x150] sm:$0xff]
    %v65 = vld [vmem:[%s3 + $0x158] sm:$0xff]
    %v66 = vld [vmem:[%s3 + $0x160] sm:$0xff]
    %v67 = vld [vmem:[%s3 + $0x168] sm:$0xff]
    %v68 = vld [vmem:[%s3 + $0x170] sm:$0xff]
    %v69 = vld [vmem:[%s3 + $0x178] sm:$0xff]
    %v70 = vpack.c.bf16 %v23, %v22
    %v71 = vpack.c.bf16 %v25, %v24
    %v72 = vpack.c.bf16 %v27, %v26
    %v73 = vpack.c.bf16 %v29, %v28
    %v74 = vpack.c.bf16 %v31, %v30
    %v75 = vpack.c.bf16 %v33, %v32
    %v76 = vpack.c.bf16 %v35, %v34
    %v77 = vpack.c.bf16 %v37, %v36
    %v78 = vpack.c.bf16 %v39, %v38
    %v79 = vpack.c.bf16 %v41, %v40
    %v80 = vpack.c.bf16 %v43, %v42
    %v81 = vpack.c.bf16 %v45, %v44
    %v82 = vpack.c.bf16 %v47, %v46
    %v83 = vpack.c.bf16 %v49, %v48
    %v84 = vpack.c.bf16 %v51, %v50
    %v85 = vpack.c.bf16 %v53, %v52
    %v86 = vpack.c.bf16 %v55, %v54
    %v87 = vpack.c.bf16 %v57, %v56
    %v88 = vpack.c.bf16 %v59, %v58
    %v89 = vpack.c.bf16 %v61, %v60
    %v90 = vpack.c.bf16 %v63, %v62
    %v91 = vpack.c.bf16 %v65, %v64
    %v92 = vpack.c.bf16 %v67, %v66
    %v93 = vpack.c.bf16 %v69, %v68
    %v94 = vld [vmem:[%s0] sm:$0xff]
    %v95 = vld [vmem:[%s0 + $0x8] sm:$0xff]
    %v96 = vld [vmem:[%s0 + $0x10] sm:$0xff]
    %v97 = vld [vmem:[%s0 + $0x18] sm:$0xff]
    %v98 = vld [vmem:[%s0 + $0x20] sm:$0xff]
    %v99 = vld [vmem:[%s0 + $0x28] sm:$0xff]
    %v100 = vld [vmem:[%s0 + $0x30] sm:$0xff]
    %v101 = vld [vmem:[%s0 + $0x38] sm:$0xff]
    %v102 = vpack.c.bf16 %v95, %v94
    %v103 = vpack.c.bf16 %v97, %v96
    %v104 = vpack.c.bf16 %v99, %v98
    %v105 = vpack.c.bf16 %v101, %v100
    %v106 = vld [vmem:[%s1] sm:$0xff]
    %v107 = vld [vmem:[%s1 + $0x8] sm:$0xff]
    %v108 = vld [vmem:[%s1 + $0x10] sm:$0xff]
    %v109 = vld [vmem:[%s1 + $0x18] sm:$0xff]
    %v110 = vld [vmem:[%s1 + $0x20] sm:$0xff]
    %v111 = vld [vmem:[%s1 + $0x28] sm:$0xff]
    %v112 = vld [vmem:[%s1 + $0x30] sm:$0xff]
    %v113 = vld [vmem:[%s1 + $0x38] sm:$0xff]
    %v114 = vpack.c.bf16 %v107, %v106
    %v115 = vpack.c.bf16 %v109, %v108
    %v116 = vpack.c.bf16 %v111, %v110
    %v117 = vpack.c.bf16 %v113, %v112
    %118 = vmatprep.subr.bf16.mxu0 0
    %119 = vmatpush1.bf16.msra.mxu0 %v78
    %120 = vmatprep.subr.bf16.mxu0 0
    %121 = vmatpush1.bf16.msra.mxu0 %v79
    %122 = vmatprep.subr.bf16.mxu0 0
    %123 = vmatpush1.bf16.msra.mxu0 %v80
    %124 = vmatprep.subr.bf16.mxu0 0
    %125 = vmatpush1.bf16.msra.mxu0 %v81
    %126 = vmatprep.subr.bf16.mxu0 0
    %127 = vmatpush1.bf16.msra.mxu0 %v82
    %128 = vmatprep.subr.bf16.mxu0 0
    %129 = vmatpush1.bf16.msra.mxu0 %v83
    %130 = vmatprep.subr.bf16.mxu0 0
    %131 = vmatpush1.bf16.msra.mxu0 %v84
    %132 = vmatprep.subr.bf16.mxu0 0
    %133 = vmatpush1.bf16.msra.mxu0 %v85
    %134 = vmatprep.subr.bf16.mxu0 0
    %135 = vmatpush1.bf16.msra.mxu0 0
    %136 = vmatprep.subr.bf16.mxu0 0
    %137 = vmatpush1.bf16.msra.mxu0 0
    %138 = vmatprep.subr.bf16.mxu0 0
    %139 = vmatpush1.bf16.msra.mxu0 0
    %140 = vmatprep.subr.bf16.mxu0 0
    %141 = vmatpush1.bf16.msra.mxu0 0
    %142 = vmatprep.subr.bf16.mxu0 0
    %143 = vmatpush1.bf16.msra.mxu0 0
    %144 = vmatprep.subr.bf16.mxu0 0
    %145 = vmatpush1.bf16.msra.mxu0 0
    %146 = vmatprep.subr.bf16.mxu0 0
    %147 = vmatpush1.bf16.msra.mxu0 0
    %148 = vmatprep.subr.bf16.mxu0 0
    %149 = vmatpush1.bf16.msra.mxu0 0
    %150 = vmatprep.mubr.bf16.mxu0 0
    %151 = vmatmul.mubr.bf16.gmra.mrb[0].mxu0 %v114
    %v152 = vpop.f32.mrb[0].mxu0
    %v153 = vadd.f32 0.0, %v152
    %v154 = vpop.f32.mrb[0].mxu0
    %v155 = vpop.f32.mrb[0].mxu0
    %v156 = vadd.f32 0.0, %v155
    %v157 = vpop.f32.mrb[0].mxu0
    %158 = vmatprep.mubr.bf16.mxu0 0
    %159 = vmatmul.mubr.bf16.gmra.mrb[0].mxu0 %v115
    %v160 = vpop.f32.mrb[0].mxu0
    %v161 = vadd.f32 0.0, %v160
    %v162 = vpop.f32.mrb[0].mxu0
    %v163 = vpop.f32.mrb[0].mxu0
    %v164 = vadd.f32 0.0, %v163
    %v165 = vpop.f32.mrb[0].mxu0
    %166 = vmatprep.mubr.bf16.mxu0 0
    %167 = vmatmul.mubr.bf16.gmra.mrb[0].mxu0 %v116
    %v168 = vpop.f32.mrb[0].mxu0
    %v169 = vadd.f32 0.0, %v168
    %v170 = vpop.f32.mrb[0].mxu0
    %v171 = vpop.f32.mrb[0].mxu0
    %v172 = vadd.f32 0.0, %v171
    %v173 = vpop.f32.mrb[0].mxu0
    %174 = vmatprep.mubr.bf16.mxu0 0
    %175 = vmatmul.mubr.bf16.gmra.mrb[0].mxu0 %v117
    %v176 = vpop.f32.mrb[0].mxu0
    %v177 = vadd.f32 0.0, %v176
    %v178 = vpop.f32.mrb[0].mxu0
    %v179 = vpop.f32.mrb[0].mxu0
    %v180 = vadd.f32 0.0, %v179
    %v181 = vpop.f32.mrb[0].mxu0
    %182 = vdwg.mxu0
    %183 = vmatprep.subr.bf16.mxu0 0
    %184 = vmatpush1.bf16.msra.mxu0 %v70
    %185 = vmatprep.subr.bf16.mxu0 0
    %186 = vmatpush1.bf16.msra.mxu0 %v71
    %187 = vmatprep.subr.bf16.mxu0 0
    %188 = vmatpush1.bf16.msra.mxu0 %v72
    %189 = vmatprep.subr.bf16.mxu0 0
    %190 = vmatpush1.bf16.msra.mxu0 %v73
    %191 = vmatprep.subr.bf16.mxu0 0
    %192 = vmatpush1.bf16.msra.mxu0 %v74
    %193 = vmatprep.subr.bf16.mxu0 0
    %194 = vmatpush1.bf16.msra.mxu0 %v75
    %195 = vmatprep.subr.bf16.mxu0 0
    %196 = vmatpush1.bf16.msra.mxu0 %v76
    %197 = vmatprep.subr.bf16.mxu0 0
    %198 = vmatpush1.bf16.msra.mxu0 %v77
    %199 = vmatprep.subr.bf16.mxu0 0
    %200 = vmatpush1.bf16.msra.mxu0 0
    %201 = vmatprep.subr.bf16.mxu0 0
    %202 = vmatpush1.bf16.msra.mxu0 0
    %203 = vmatprep.subr.bf16.mxu0 0
    %204 = vmatpush1.bf16.msra.mxu0 0
    %205 = vmatprep.subr.bf16.mxu0 0
    %206 = vmatpush1.bf16.msra.mxu0 0
    %207 = vmatprep.subr.bf16.mxu0 0
    %208 = vmatpush1.bf16.msra.mxu0 0
    %209 = vmatprep.subr.bf16.mxu0 0
    %210 = vmatpush1.bf16.msra.mxu0 0
    %211 = vmatprep.subr.bf16.mxu0 0
    %212 = vmatpush1.bf16.msra.mxu0 0
    %213 = vmatprep.subr.bf16.mxu0 0
    %214 = vmatpush1.bf16.msra.mxu0 0
    %215 = vmatprep.mubr.bf16.mxu0 0
    %216 = vmatmul.mubr.bf16.gmra.mrb[0].mxu0 %v102
    %v217 = vpop.f32.mrb[0].mxu0
    %v218 = vadd.f32 %v153, %v217
    %v219 = vpop.f32.mrb[0].mxu0
    %v220 = vpop.f32.mrb[0].mxu0
    %v221 = vadd.f32 %v156, %v220
    %v222 = vpop.f32.mrb[0].mxu0
    %223 = vmatprep.mubr.bf16.mxu0 0
    %224 = vmatmul.mubr.bf16.gmra.mrb[0].mxu0 %v103
    %v225 = vpop.f32.mrb[0].mxu0
    %v226 = vadd.f32 %v161, %v225
    %v227 = vpop.f32.mrb[0].mxu0
    %v228 = vpop.f32.mrb[0].mxu0
    %v229 = vadd.f32 %v164, %v228
    %v230 = vpop.f32.mrb[0].mxu0
    %231 = vmatprep.mubr.bf16.mxu0 0
    %232 = vmatmul.mubr.bf16.gmra.mrb[0].mxu0 %v104
    %v233 = vpop.f32.mrb[0].mxu0
    %v234 = vadd.f32 %v169, %v233
    %v235 = vpop.f32.mrb[0].mxu0
    %v236 = vpop.f32.mrb[0].mxu0
    %v237 = vadd.f32 %v172, %v236
    %v238 = vpop.f32.mrb[0].mxu0
    %239 = vmatprep.mubr.bf16.mxu0 0
    %240 = vmatmul.mubr.bf16.gmra.mrb[0].mxu0 %v105
    %v241 = vpop.f32.mrb[0].mxu0
    %v242 = vadd.f32 %v177, %v241
    %v243 = vpop.f32.mrb[0].mxu0
    %v244 = vpop.f32.mrb[0].mxu0
    %v245 = vadd.f32 %v180, %v244
    %v246 = vpop.f32.mrb[0].mxu0
    %247 = vdwg.mxu0
    %v248 = vld [vmem:[%s2] sm:$0xff]
    %v249 = vld [vmem:[%s2 + $0x8] sm:$0xff]
    %v250 = vld [vmem:[%s2 + $0x10] sm:$0xff]
    %v251 = vld [vmem:[%s2 + $0x18] sm:$0xff]
    %v252 = vld [vmem:[%s2 + $0x20] sm:$0xff]
    %v253 = vld [vmem:[%s2 + $0x28] sm:$0xff]
    %v254 = vld [vmem:[%s2 + $0x30] sm:$0xff]
    %v255 = vld [vmem:[%s2 + $0x38] sm:$0xff]
    %v256 = vpack.c.bf16 %v249, %v248
    %v257 = vpack.c.bf16 %v251, %v250
    %v258 = vpack.c.bf16 %v253, %v252
    %v259 = vpack.c.bf16 %v255, %v254
    %260 = vmatprep.subr.bf16.mxu0 0
    %261 = vmatpush1.bf16.msra.mxu0 %v86
    %262 = vmatprep.subr.bf16.mxu0 0
    %263 = vmatpush1.bf16.msra.mxu0 %v87
    %264 = vmatprep.subr.bf16.mxu0 0
    %265 = vmatpush1.bf16.msra.mxu0 %v88
    %266 = vmatprep.subr.bf16.mxu0 0
    %267 = vmatpush1.bf16.msra.mxu0 %v89
    %268 = vmatprep.subr.bf16.mxu0 0
    %269 = vmatpush1.bf16.msra.mxu0 %v90
    %270 = vmatprep.subr.bf16.mxu0 0
    %271 = vmatpush1.bf16.msra.mxu0 %v91
    %272 = vmatprep.subr.bf16.mxu0 0
    %273 = vmatpush1.bf16.msra.mxu0 %v92
    %274 = vmatprep.subr.bf16.mxu0 0
    %275 = vmatpush1.bf16.msra.mxu0 %v93
    %276 = vmatprep.subr.bf16.mxu0 0
    %277 = vmatpush1.bf16.msra.mxu0 0
    %278 = vmatprep.subr.bf16.mxu0 0
    %279 = vmatpush1.bf16.msra.mxu0 0
    %280 = vmatprep.subr.bf16.mxu0 0
    %281 = vmatpush1.bf16.msra.mxu0 0
    %282 = vmatprep.subr.bf16.mxu0 0
    %283 = vmatpush1.bf16.msra.mxu0 0
    %284 = vmatprep.subr.bf16.mxu0 0
    %285 = vmatpush1.bf16.msra.mxu0 0
    %286 = vmatprep.subr.bf16.mxu0 0
    %287 = vmatpush1.bf16.msra.mxu0 0
    %288 = vmatprep.subr.bf16.mxu0 0
    %289 = vmatpush1.bf16.msra.mxu0 0
    %290 = vmatprep.subr.bf16.mxu0 0
    %291 = vmatpush1.bf16.msra.mxu0 0
    %292 = vmatprep.mubr.bf16.mxu0 0
    %293 = vmatmul.mubr.bf16.gmra.mrb[0].mxu0 %v256
    %v294 = vpop.f32.mrb[0].mxu0
    %v295 = vadd.f32 0.0, %v294
    %v296 = vpop.f32.mrb[0].mxu0
    %v297 = vpop.f32.mrb[0].mxu0
    %v298 = vadd.f32 0.0, %v297
    %v299 = vpop.f32.mrb[0].mxu0
    %300 = vmatprep.mubr.bf16.mxu0 0
    %301 = vmatmul.mubr.bf16.gmra.mrb[0].mxu0 %v257
    %v302 = vpop.f32.mrb[0].mxu0
    %v303 = vadd.f32 0.0, %v302
    %v304 = vpop.f32.mrb[0].mxu0
    %v305 = vpop.f32.mrb[0].mxu0
    %v306 = vadd.f32 0.0, %v305
    %v307 = vpop.f32.mrb[0].mxu0
    %308 = vmatprep.mubr.bf16.mxu0 0
    %309 = vmatmul.mubr.bf16.gmra.mrb[0].mxu0 %v258
    %v310 = vpop.f32.mrb[0].mxu0
    %v311 = vadd.f32 0.0, %v310
    %v312 = vpop.f32.mrb[0].mxu0
    %v313 = vpop.f32.mrb[0].mxu0
    %v314 = vadd.f32 0.0, %v313
    %v315 = vpop.f32.mrb[0].mxu0
    %316 = vmatprep.mubr.bf16.mxu0 0
    %317 = vmatmul.mubr.bf16.gmra.mrb[0].mxu0 %v259
    %v318 = vpop.f32.mrb[0].mxu0
    %v319 = vadd.f32 0.0, %v318
    %v320 = vpop.f32.mrb[0].mxu0
    %v321 = vpop.f32.mrb[0].mxu0
    %v322 = vadd.f32 0.0, %v321
    %v323 = vpop.f32.mrb[0].mxu0
    %324 = vdwg.mxu0
    %v325 = vadd.f32 %v218, %v295
    %v326 = vadd.f32 %v221, %v298
    %v327 = vadd.f32 %v226, %v303
    %v328 = vadd.f32 %v229, %v306
    %v329 = vadd.f32 %v234, %v311
    %v330 = vadd.f32 %v237, %v314
    %v331 = vadd.f32 %v242, %v319
    %v332 = vadd.f32 %v245, %v322
    %v333 = vld [vmem:[%s4] sm:$0x1]
    %v335 = vlaneseq
    %v336 = vshrl.u32 %v335, 7
    %v337 = vsub.s32 0, %v336
    %v338 = vrot.slane %v333, %v337
    %v340 = vadd.f32 %v325, %v338
    %v341 = vadd.f32 %v326, %v338
    %v342 = vadd.f32 %v327, %v338
    %v343 = vadd.f32 %v328, %v338
    %v344 = vadd.f32 %v329, %v338
    %v345 = vadd.f32 %v330, %v338
    %v346 = vadd.f32 %v331, %v338
    %v347 = vadd.f32 %v332, %v338
    %348 = vst [vmem:[#allocation2] sm:$0xff] %v340
    %349 = vst [vmem:[#allocation2 + $0x8] sm:$0xff] %v341
    %350 = vst [vmem:[#allocation2 + $0x10] sm:$0xff] %v342
    %351 = vst [vmem:[#allocation2 + $0x18] sm:$0xff] %v343
    %352 = vst [vmem:[#allocation2 + $0x20] sm:$0xff] %v344
    %353 = vst [vmem:[#allocation2 + $0x28] sm:$0xff] %v345
    %354 = vst [vmem:[#allocation2 + $0x30] sm:$0xff] %v346
    %355 = vst [vmem:[#allocation2 + $0x38] sm:$0xff] %v347
    // Predicated region
    $region22: #{_lambda_.7} parent=1 // pred_check
      _
    $region23: #{_lambda_.7} parent=1 // pred_check_branch
      %357 = sbr.rel (0) target = $region25
    $region24: #{_lambda_.7} parent=1 // pred_region
      %s359 = ssub.s32 1024, 1024
      %360 = vsyncadd [#allocation3], %s359
      %s361 = sshll.u32 [#allocation2], 4
      %s362 = int_to_ptr.vmem [resolvable:$true] %s361
      %367 = dma.vmem_to_hbm [thread:$0]  %s362, 1024, %s5, [#allocation3], 128, 128, 8
    $region25: #{_lambda_.7} parent=1 // pred_fallthru
      _
    // Predicated region
    $region26: #{_lambda_.7} parent=1 // pred_check
      _
    $region27: #{_lambda_.7} parent=1 // pred_check_branch
      %369 = sbr.rel (0) target = $region29
    $region28: #{_lambda_.7} parent=1 // pred_region
      %370 = dma.done [#allocation3], 1024
    $region29: #{_lambda_.7} parent=1 // pred_fallthru
      _
    %371 = vsyncpa [#allocation3], 1

</llo_original>
